<compile_context>
chip_gen: v7x
topology: tpu7x:2x2x1
jax: 0.10.0
libtpu: 0.0.40
codegen_flags: <defaults>
</compile_context>

<pallas_src>
import jax
import jax.numpy as jnp
from jax.experimental import pallas as pl
from jax.experimental.pallas import tpu as pltpu


def _temporal_attention_kernel(x_ref, w1a_ref, w1b_ref, b1_ref, w2_ref, b2_ref,
                               o_ref):
    # x_ref: (Bt, C, T) block; T is the lane axis and is kept whole.
    xf = x_ref[...].astype(jnp.float32)

    # AdaptiveAvgPool1d(1) / AdaptiveMaxPool1d(1) over the temporal axis.
    avg_pooled = jnp.mean(xf, axis=-1)                    # (Bt, C)
    max_pooled = jnp.max(xf, axis=-1)                     # (Bt, C)

    # fc[0] applied to cat([avg, max], dim=1), expressed without the lane-axis
    # concat: avg @ W1[:, :C].T + max @ W1[:, C:].T + b1.
    h = (jnp.dot(avg_pooled, w1a_ref[...], preferred_element_type=jnp.float32)
         + jnp.dot(max_pooled, w1b_ref[...], preferred_element_type=jnp.float32)
         + b1_ref[...])                                   # (Bt, C//r)
    h = jnp.maximum(h, 0.0)                               # ReLU

    # fc[3]: Linear(C//r -> C), then Sigmoid.
    logits = (jnp.dot(h, w2_ref[...], preferred_element_type=jnp.float32)
              + b2_ref[...])                              # (Bt, C)
    scale = jax.nn.sigmoid(logits)                        # (Bt, C)

    # x * scale.view(B, C, 1).expand_as(x). Re-read the tile from VMEM here so
    # the whole block never has to stay live in vregs across the dots/sigmoid.
    o_ref[...] = (x_ref[...].astype(jnp.float32)
                  * scale[:, :, None]).astype(o_ref.dtype)


def _pick_block_b(b, c, t, itemsize, *, vmem_cap,
                  budget_bytes=12 * 1024 * 1024):
    """Batch rows per grid step: big tiles (amortize per-step overhead) that
    still fit the per-generation VMEM cap, with >= 2 grid steps when B > 1 so
    v7x's second TensorCore gets work."""
    bytes_per_row = c * t * itemsize
    # Keep roughly 6 tiles (double-buffered in + out + slack) under the cap.
    budget = min(budget_bytes,
                 max(bytes_per_row, (vmem_cap - 4 * 1024 * 1024) // 6))
    max_rows = max(1, budget // bytes_per_row)
    if b > 1:
        max_rows = min(max_rows, pl.cdiv(b, 2))   # at least 2 grid steps
    block_b = int(min(b, max_rows))
    if block_b >= 8:
        block_b = (block_b // 8) * 8              # MXU-row granularity
    return max(1, block_b)


def temporal_attention(x, w1, b1, w2, b2, *, block_b=None):
    """TemporalAttention forward.

    x : (B, C, T)       -- (batch, channels, time), PyTorch layout, f32/bf16.
    w1: (C//r, 2C), b1: (C//r,)   -- fc[0] in PyTorch Linear (out, in) layout.
    w2: (C, C//r),  b2: (C,)      -- fc[3].
    block_b: batch rows per grid step (need not divide B); auto-chosen if None.
    """
    b, c, t = x.shape
    hidden = w1.shape[0]
    assert w1.shape == (hidden, 2 * c) and w2.shape == (c, hidden)
    assert b1.shape == (hidden,) and b2.shape == (c,)

    itemsize = jnp.dtype(x.dtype).itemsize

    # Split fc[0]'s weight into its avg- / max-pooled halves and put all
    # parameters in (in, out) layout; biases as 2-D rows.
    w1a = jnp.transpose(w1[:, :c]).astype(jnp.float32)    # (C, hidden)
    w1b = jnp.transpose(w1[:, c:]).astype(jnp.float32)    # (C, hidden)
    w2_t = jnp.transpose(w2).astype(jnp.float32)           # (hidden, C)
    b1_2d = b1.reshape(1, hidden).astype(jnp.float32)
    b2_2d = b2.reshape(1, c).astype(jnp.float32)
    param_bytes = 4 * (2 * c * hidden + hidden + hidden * c + c)

    # Generation-aware VMEM cap (v7x has 64 MiB physical per TC, v5e/v6e 128).
    try:
        physical_vmem = int(pltpu.get_tpu_info().vmem_capacity_bytes)
    except Exception:
        physical_vmem = 64 * 1024 * 1024
    vmem_cap = max(16 * 1024 * 1024, physical_vmem - 8 * 1024 * 1024)

    if block_b is None:
        block_b = _pick_block_b(b, c, t, itemsize, vmem_cap=vmem_cap)
    block_b = int(min(block_b, b))
    grid = (pl.cdiv(b, block_b),)    # ragged tail block is safe (row-indep.)

    tile_bytes = block_b * c * t * itemsize
    vmem_limit = int(min(
        vmem_cap,
        max(16 * 1024 * 1024, 6 * tile_bytes + param_bytes + (2 << 20))))

    flops = int(2 * b * (2 * c * hidden + hidden * c)   # the two tiny matmuls
                + 4 * b * c * t)                        # pools + final scaling
    bytes_accessed = int(2 * b * c * t * itemsize + param_bytes)

    x_spec = pl.BlockSpec((block_b, c, t), lambda i: (i, 0, 0))
    out_spec = pl.BlockSpec((block_b, c, t), lambda i: (i, 0, 0))
    w1a_spec = pl.BlockSpec((c, hidden), lambda i: (0, 0))
    w1b_spec = pl.BlockSpec((c, hidden), lambda i: (0, 0))
    b1_spec = pl.BlockSpec((1, hidden), lambda i: (0, 0))
    w2_spec = pl.BlockSpec((hidden, c), lambda i: (0, 0))
    b2_spec = pl.BlockSpec((1, c), lambda i: (0, 0))

    return pl.pallas_call(
        _temporal_attention_kernel,
        out_shape=jax.ShapeDtypeStruct((b, c, t), x.dtype),
        grid=grid,
        in_specs=[x_spec, w1a_spec, w1b_spec, b1_spec, w2_spec, b2_spec],
        out_specs=out_spec,
        compiler_params=pltpu.CompilerParams(
            dimension_semantics=("parallel",),   # megacore-shard the B axis
            vmem_limit_bytes=vmem_limit,
        ),
        cost_estimate=pl.CostEstimate(
            flops=flops,
            transcendentals=int(b * c),          # sigmoid
            bytes_accessed=bytes_accessed,
        ),
    )(x, w1a, w1b, b1_2d, w2_t, b2_2d)


def temporal_attention_reference(x, w1, b1, w2, b2):
    """Pure-JAX reference mirroring the PyTorch forward exactly."""
    avg_pooled = jnp.mean(x, axis=-1)
    max_pooled = jnp.max(x, axis=-1)
    combined = jnp.concatenate([avg_pooled, max_pooled], axis=1)   # (B, 2C)
    h = jnp.maximum(combined @ w1.T + b1, 0.0)
    scale = jax.nn.sigmoid(h @ w2.T + b2)
    return x * scale[:, :, None]


if __name__ == "__main__":
    # Shapes implied by StudentModel: channels = hidden_dim = 48, reduction = 8.
    # T = 128 keeps the temporal (lane) axis dense; B = 32 keeps the demo small.
    B, C, T = 32, 48, 128
    reduction = 8
    hidden = C // reduction          # 6

    key = jax.random.PRNGKey(0)
    kx, k1, k2, k3, k4 = jax.random.split(key, 5)

    x = jax.random.normal(kx, (B, C, T), dtype=jnp.float32)
    # Deterministic synthetic parameters (PyTorch Linear shapes: (out, in)).
    w1 = jax.random.normal(k1, (hidden, 2 * C), dtype=jnp.float32) * 0.1
    b1 = jax.random.normal(k2, (hidden,), dtype=jnp.float32) * 0.1
    w2 = jax.random.normal(k3, (C, hidden), dtype=jnp.float32) * 0.1
    b2 = jax.random.normal(k4, (C,), dtype=jnp.float32) * 0.1

    # Auto-chosen block_b: >= 2 grid steps (megacore) with the largest tile
    # that fits the per-generation VMEM budget.
    out = temporal_attention(x, w1, b1, w2, b2)
    out = jax.block_until_ready(out)

    ref = temporal_attention_reference(x, w1, b1, w2, b2)
    assert out.shape == (B, C, T)
    assert jnp.allclose(out, ref, atol=1e-5, rtol=1e-5), \
        float(jnp.max(jnp.abs(out - ref)))

    # Ragged-batch path: B not a multiple of block_b exercises the cdiv grid.
    x_r = x[:20]
    out_r = jax.block_until_ready(
        temporal_attention(x_r, w1, b1, w2, b2, block_b=16))
    ref_r = temporal_attention_reference(x_r, w1, b1, w2, b2)
    assert jnp.allclose(out_r, ref_r, atol=1e-5, rtol=1e-5), \
        float(jnp.max(jnp.abs(out_r - ref_r)))

    print("KERNEL_OK")
</pallas_src>

<mosaic_0001>
module attributes {stable_mosaic.version = 11 : i64} {
  func.func @_temporal_attention_kernel(%arg0: i32, %arg1: memref<16x48x128xf32, #tpu.memory_space<vmem>>, %arg2: memref<48x6xf32, #tpu.memory_space<vmem>>, %arg3: memref<48x6xf32, #tpu.memory_space<vmem>>, %arg4: memref<1x6xf32, #tpu.memory_space<vmem>>, %arg5: memref<6x48xf32, #tpu.memory_space<vmem>>, %arg6: memref<1x48xf32, #tpu.memory_space<vmem>>, %arg7: memref<16x48x128xf32, #tpu.memory_space<vmem>>) attributes {dimension_semantics = [#tpu.dimension_semantics<parallel>], iteration_bounds = array<i64: 2>, scalar_prefetch = 0 : i64, scratch_operands = 0 : i64, tpu.core_type = #tpu.core_type<tc>, window_params = [{transform_indices = @transform_0, window_bounds = array<i64: 16, 48, 128>}, {pipeline_mode = #tpu.pipeline_mode<synchronous>, transform_indices = @transform_1, window_bounds = array<i64: 48, 6>}, {pipeline_mode = #tpu.pipeline_mode<synchronous>, transform_indices = @transform_2, window_bounds = array<i64: 48, 6>}, {pipeline_mode = #tpu.pipeline_mode<synchronous>, transform_indices = @transform_3, window_bounds = array<i64: 1, 6>}, {pipeline_mode = #tpu.pipeline_mode<synchronous>, transform_indices = @transform_4, window_bounds = array<i64: 6, 48>}, {pipeline_mode = #tpu.pipeline_mode<synchronous>, transform_indices = @transform_5, window_bounds = array<i64: 1, 48>}, {transform_indices = @transform_6, window_bounds = array<i64: 16, 48, 128>}]} {
    %c0 = arith.constant 0 : index
    %c0_0 = arith.constant 0 : index
    %c0_1 = arith.constant 0 : index
    %0 = vector.load %arg1[%c0, %c0_0, %c0_1] : memref<16x48x128xf32, #tpu.memory_space<vmem>>, vector<16x48x128xf32>
    %cst = arith.constant dense<0.000000e+00> : vector<16x48xf32>
    %1 = vector.multi_reduction <add>, %0, %cst [2] : vector<16x48x128xf32> to vector<16x48xf32>
    %cst_2 = arith.constant 1.280000e+02 : f32
    %2 = vector.broadcast %cst_2 : f32 to vector<16x48xf32>
    %3 = arith.divf %1, %2 : vector<16x48xf32>
    %cst_3 = arith.constant dense<0xFF800000> : vector<16x48xf32>
    %4 = vector.multi_reduction <maximumf>, %0, %cst_3 [2] : vector<16x48x128xf32> to vector<16x48xf32>
    %c0_4 = arith.constant 0 : index
    %c0_5 = arith.constant 0 : index
    %5 = vector.load %arg2[%c0_4, %c0_5] : memref<48x6xf32, #tpu.memory_space<vmem>>, vector<48x6xf32>
    %cst_6 = arith.constant dense<0.000000e+00> : vector<16x6xf32>
    %6 = tpu.matmul %3, %5, %cst_6 {dimension_numbers = #tpu.dot_dimension_numbers<[1], [0], [0], [1], [0, 0, 1, 1], [], []>} : vector<16x48xf32>, vector<48x6xf32>, vector<16x6xf32> -> vector<16x6xf32>
    %c0_7 = arith.constant 0 : index
    %c0_8 = arith.constant 0 : index
    %7 = vector.load %arg3[%c0_7, %c0_8] : memref<48x6xf32, #tpu.memory_space<vmem>>, vector<48x6xf32>
    %cst_9 = arith.constant dense<0.000000e+00> : vector<16x6xf32>
    %8 = tpu.matmul %4, %7, %cst_9 {dimension_numbers = #tpu.dot_dimension_numbers<[1], [0], [0], [1], [0, 0, 1, 1], [], []>} : vector<16x48xf32>, vector<48x6xf32>, vector<16x6xf32> -> vector<16x6xf32>
    %9 = arith.addf %6, %8 : vector<16x6xf32>
    %c0_10 = arith.constant 0 : index
    %c0_11 = arith.constant 0 : index
    %10 = vector.load %arg4[%c0_10, %c0_11] : memref<1x6xf32, #tpu.memory_space<vmem>>, vector<1x6xf32>
    %11 = vector.broadcast %10 : vector<1x6xf32> to vector<16x6xf32>
    %12 = arith.addf %9, %11 : vector<16x6xf32>
    %cst_12 = arith.constant 0.000000e+00 : f32
    %13 = vector.broadcast %cst_12 : f32 to vector<16x6xf32>
    %14 = arith.maximumf %12, %13 : vector<16x6xf32>
    %c0_13 = arith.constant 0 : index
    %c0_14 = arith.constant 0 : index
    %15 = vector.load %arg5[%c0_13, %c0_14] : memref<6x48xf32, #tpu.memory_space<vmem>>, vector<6x48xf32>
    %cst_15 = arith.constant dense<0.000000e+00> : vector<16x48xf32>
    %16 = tpu.matmul %14, %15, %cst_15 {dimension_numbers = #tpu.dot_dimension_numbers<[1], [0], [0], [1], [0, 0, 1, 1], [], []>} : vector<16x6xf32>, vector<6x48xf32>, vector<16x48xf32> -> vector<16x48xf32>
    %c0_16 = arith.constant 0 : index
    %c0_17 = arith.constant 0 : index
    %17 = vector.load %arg6[%c0_16, %c0_17] : memref<1x48xf32, #tpu.memory_space<vmem>>, vector<1x48xf32>
    %18 = vector.broadcast %17 : vector<1x48xf32> to vector<16x48xf32>
    %19 = arith.addf %16, %18 : vector<16x48xf32>
    %20 = arith.negf %19 : vector<16x48xf32>
    %21 = math.exp %20 : vector<16x48xf32>
    %cst_18 = arith.constant 1.000000e+00 : f32
    %22 = vector.broadcast %cst_18 : f32 to vector<16x48xf32>
    %23 = arith.addf %22, %21 : vector<16x48xf32>
    %24 = arith.divf %22, %23 : vector<16x48xf32>
    %c0_19 = arith.constant 0 : index
    %c0_20 = arith.constant 0 : index
    %c0_21 = arith.constant 0 : index
    %25 = vector.load %arg1[%c0_19, %c0_20, %c0_21] : memref<16x48x128xf32, #tpu.memory_space<vmem>>, vector<16x48x128xf32>
    %26 = vector.shape_cast %24 : vector<16x48xf32> to vector<16x48x1xf32>
    %27 = vector.broadcast %26 : vector<16x48x1xf32> to vector<16x48x128xf32>
    %28 = arith.mulf %25, %27 : vector<16x48x128xf32>
    %c0_22 = arith.constant 0 : index
    %c0_23 = arith.constant 0 : index
    %c0_24 = arith.constant 0 : index
    %29 = vector.load %arg7[%c0_22, %c0_23, %c0_24] : memref<16x48x128xf32, #tpu.memory_space<vmem>>, vector<16x48x128xf32>
    tpu.vector_store %arg7[%c0_22, %c0_23, %c0_24], %28 {strides = array<i32>} : memref<16x48x128xf32, #tpu.memory_space<vmem>>, vector<16x48x128xf32>,
    return
  }
  func.func @transform_0(%arg0: i32) -> (i32, i32, i32) {
    %c0_i32 = arith.constant 0 : i32
    %c0_i32_0 = arith.constant 0 : i32
    %c0_i32_1 = arith.constant 0 : i32
    return %arg0, %c0_i32, %c0_i32_0 : i32, i32, i32
  }
  func.func @transform_1(%arg0: i32) -> (i32, i32) {
    %c0_i32 = arith.constant 0 : i32
    %c0_i32_0 = arith.constant 0 : i32
    %c0_i32_1 = arith.constant 0 : i32
    return %c0_i32, %c0_i32_0 : i32, i32
  }
  func.func @transform_2(%arg0: i32) -> (i32, i32) {
    %c0_i32 = arith.constant 0 : i32
    %c0_i32_0 = arith.constant 0 : i32
    %c0_i32_1 = arith.constant 0 : i32
    return %c0_i32, %c0_i32_0 : i32, i32
  }
  func.func @transform_3(%arg0: i32) -> (i32, i32) {
    %c0_i32 = arith.constant 0 : i32
    %c0_i32_0 = arith.constant 0 : i32
    %c0_i32_1 = arith.constant 0 : i32
    return %c0_i32, %c0_i32_0 : i32, i32
  }
  func.func @transform_4(%arg0: i32) -> (i32, i32) {
    %c0_i32 = arith.constant 0 : i32
    %c0_i32_0 = arith.constant 0 : i32
    %c0_i32_1 = arith.constant 0 : i32
    return %c0_i32, %c0_i32_0 : i32, i32
  }
  func.func @transform_5(%arg0: i32) -> (i32, i32) {
    %c0_i32 = arith.constant 0 : i32
    %c0_i32_0 = arith.constant 0 : i32
    %c0_i32_1 = arith.constant 0 : i32
    return %c0_i32, %c0_i32_0 : i32, i32
  }
  func.func @transform_6(%arg0: i32) -> (i32, i32, i32) {
    %c0_i32 = arith.constant 0 : i32
    %c0_i32_0 = arith.constant 0 : i32
    %c0_i32_1 = arith.constant 0 : i32
    return %arg0, %c0_i32, %c0_i32_0 : i32, i32, i32
  }
}

</mosaic_0001>

<llo_original>
// kernel: tpu_custom_call.1
$region0: #{tpu_custom_call.1}
  #allocation0 [shape = 'u32[]', space=smem, size = 0x4, offset = 0x4, fixed_abs, tag = 'smem constant byte address 0x4 - core index']
  #allocation1 [shape = 'u32[144,128]{1,0:T(1,128)}', space=vmem, size = 0x12000, scoped, tag = 'internal scratch']
  %s0 = inlined_call_operand.hbm [shape: f32[32,48,128], index: 0, kind: input, shape index: {}]
  %s1 = inlined_call_operand.vmem [shape: f32[48,6], index: 1, kind: input, shape index: {}]
  %s2 = inlined_call_operand.vmem [shape: f32[48,6], index: 2, kind: input, shape index: {}]
  %s3 = inlined_call_operand.vmem [shape: f32[1,6], index: 3, kind: input, shape index: {}]
  %s4 = inlined_call_operand.vmem [shape: f32[6,48], index: 4, kind: input, shape index: {}]
  %s5 = inlined_call_operand.vmem [shape: f32[1,48], index: 5, kind: input, shape index: {}]
  %s6 = inlined_call_operand.hbm [shape: f32[32,48,128], index: 6, kind: output, shape index: {}]
  %s7 = sld [smem:[#allocation0]]
  $region61: #{tpu_custom_call.1} parent=0
    _
  %s9 = ssub.s32 1, %s7
  %s10 = scalar_select 0, %s9, %s7
  $region1: #{tpu_custom_call.1} parent=0
    #allocation2 [shape = 'u8[786432]{0}', space=vmem, size = 0xc0000, scoped, tag = 'input window, operand 0']
    #allocation3 [shape = 's32[2]{0}', space=sflag, size = 0x8, scoped, tag = 'scoped memory for tpu_custom_call.1']
    #allocation4 [shape = 's32[2]{0}', space=sflag, size = 0x8, scoped, tag = 'scoped memory for tpu_custom_call.1']
    #allocation5 [shape = 'u8[786432]{0}', space=vmem, size = 0xc0000, scoped, tag = 'output window, operand 0']
    %11 = vsyncpa [#allocation3], 0
    %s12 = scalar_lea.sflag [#allocation3], 1
    %13 = vsyncpa %s12, 0
    %14 = vsyncpa [#allocation4], 0
    %s15 = scalar_lea.sflag [#allocation4], 1
    %16 = vsyncpa %s15, 0
    loop: start=0, step=1, limit=4
    $region2: #{tpu_custom_call.1} parent=1 // loop_pre_header
      _
    $region3: #{tpu_custom_call.1} parent=1 // loop_header
      %s18 = sphi 0, %s22
      %p19 = scmp.ge.s32.totalorder %s18, 4
      %s28 = sphi 0, %s30
      %s31 = sphi 0, %s28
      %s32 = sphi 0, %s31
      %s48 = sphi 0, %s32
      %s52 = sphi 0, %s52
      %s54 = sphi 0, %s52
      %s55 = sphi 0, %s54
      %s69 = sphi 0, %s55
      %s73 = sphi 0, %s73
      %s75 = sphi 0, %s73
      %s76 = sphi 0, %s75
      %s90 = sphi 0, %s76
      %s94 = sphi 0, %s94
      %s96 = sphi 0, %s94
      %s97 = sphi 0, %s96
      %s111 = sphi 0, %s97
      %s115 = sphi 0, %s115
      %s117 = sphi 0, %s115
      %s118 = sphi 0, %s117
      %s132 = sphi 0, %s118
      %s136 = sphi 0, %s136
      %s138 = sphi 0, %s136
      %s139 = sphi 0, %s138
      %s153 = sphi 0, %s139
      %s159 = sphi 0, %s161
      %s162 = sphi 0, %s159
      %s163 = sphi 0, %s162
      %s179 = sphi 0, %s163
    $region4: #{tpu_custom_call.1} parent=1 // loop_header_branch
      %21 = sbr.rel (%p19) target = $region8
    $region5: #{tpu_custom_call.1} parent=1 // loop_body
      %s23 = ssub.s32 %s18, 1
      %s24 = ssub.s32 %s18, 2
      %s25 = sadd.s32 %s18, 1
      %s26 = ssub.s32 %s18, %s25
      %p27 = scmp.eq.s32.totalorder %s26, 0
      %s29 = sadd.s32 %s28, 1
      %s30 = scalar_select %p27, %s28, %s29
      %p33 = pneg %p27
      %p34 = scmp.eq.s32.totalorder %s18, 1
      %p35 = por %p33, %p34
      %p36 = scmp.ne.s32.totalorder %s28, %s31
      %p37 = scmp.eq.s32.totalorder %s18, 0
      %p38 = por %p36, %p37
      %p39 = scmp.ne.s32.totalorder %s28, %s31
      %p40 = scmp.eq.s32.totalorder %s23, 1
      %p41 = por %p39, %p40
      %p42 = scmp.ne.s32.totalorder %s31, %s32
      %p43 = scmp.eq.s32.totalorder %s23, 0
      %p44 = por %p42, %p43
      %p45 = scmp.ne.s32.totalorder %s31, %s32
      %p46 = scmp.eq.s32.totalorder %s24, 1
      %p47 = por %p45, %p46
      %p49 = scmp.ne.s32.totalorder %s32, %s48
      %p50 = scmp.eq.s32.totalorder %s24, 0
      %p51 = por %p49, %p50
      %s53 = sadd.s32 %s52, 1
      %p56 = scmp.eq.s32.totalorder %s18, 1
      %p57 = scmp.ne.s32.totalorder %s52, %s54
      %p58 = scmp.eq.s32.totalorder %s18, 0
      %p59 = por %p57, %p58
      %p60 = scmp.ne.s32.totalorder %s52, %s54
      %p61 = scmp.eq.s32.totalorder %s23, 1
      %p62 = por %p60, %p61
      %p63 = scmp.ne.s32.totalorder %s54, %s55
      %p64 = scmp.eq.s32.totalorder %s23, 0
      %p65 = por %p63, %p64
      %p66 = scmp.ne.s32.totalorder %s54, %s55
      %p67 = scmp.eq.s32.totalorder %s24, 1
      %p68 = por %p66, %p67
      %p70 = scmp.ne.s32.totalorder %s55, %s69
      %p71 = scmp.eq.s32.totalorder %s24, 0
      %p72 = por %p70, %p71
      %s74 = sadd.s32 %s73, 1
      %p77 = scmp.eq.s32.totalorder %s18, 1
      %p78 = scmp.ne.s32.totalorder %s73, %s75
      %p79 = scmp.eq.s32.totalorder %s18, 0
      %p80 = por %p78, %p79
      %p81 = scmp.ne.s32.totalorder %s73, %s75
      %p82 = scmp.eq.s32.totalorder %s23, 1
      %p83 = por %p81, %p82
      %p84 = scmp.ne.s32.totalorder %s75, %s76
      %p85 = scmp.eq.s32.totalorder %s23, 0
      %p86 = por %p84, %p85
      %p87 = scmp.ne.s32.totalorder %s75, %s76
      %p88 = scmp.eq.s32.totalorder %s24, 1
      %p89 = por %p87, %p88
      %p91 = scmp.ne.s32.totalorder %s76, %s90
      %p92 = scmp.eq.s32.totalorder %s24, 0
      %p93 = por %p91, %p92
      %s95 = sadd.s32 %s94, 1
      %p98 = scmp.eq.s32.totalorder %s18, 1
      %p99 = scmp.ne.s32.totalorder %s94, %s96
      %p100 = scmp.eq.s32.totalorder %s18, 0
      %p101 = por %p99, %p100
      %p102 = scmp.ne.s32.totalorder %s94, %s96
      %p103 = scmp.eq.s32.totalorder %s23, 1
      %p104 = por %p102, %p103
      %p105 = scmp.ne.s32.totalorder %s96, %s97
      %p106 = scmp.eq.s32.totalorder %s23, 0
      %p107 = por %p105, %p106
      %p108 = scmp.ne.s32.totalorder %s96, %s97
      %p109 = scmp.eq.s32.totalorder %s24, 1
      %p110 = por %p108, %p109
      %p112 = scmp.ne.s32.totalorder %s97, %s111
      %p113 = scmp.eq.s32.totalorder %s24, 0
      %p114 = por %p112, %p113
      %s116 = sadd.s32 %s115, 1
      %p119 = scmp.eq.s32.totalorder %s18, 1
      %p120 = scmp.ne.s32.totalorder %s115, %s117
      %p121 = scmp.eq.s32.totalorder %s18, 0
      %p122 = por %p120, %p121
      %p123 = scmp.ne.s32.totalorder %s115, %s117
      %p124 = scmp.eq.s32.totalorder %s23, 1
      %p125 = por %p123, %p124
      %p126 = scmp.ne.s32.totalorder %s117, %s118
      %p127 = scmp.eq.s32.totalorder %s23, 0
      %p128 = por %p126, %p127
      %p129 = scmp.ne.s32.totalorder %s117, %s118
      %p130 = scmp.eq.s32.totalorder %s24, 1
      %p131 = por %p129, %p130
      %p133 = scmp.ne.s32.totalorder %s118, %s132
      %p134 = scmp.eq.s32.totalorder %s24, 0
      %p135 = por %p133, %p134
      %s137 = sadd.s32 %s136, 1
      %p140 = scmp.eq.s32.totalorder %s18, 1
      %p141 = scmp.ne.s32.totalorder %s136, %s138
      %p142 = scmp.eq.s32.totalorder %s18, 0
      %p143 = por %p141, %p142
      %p144 = scmp.ne.s32.totalorder %s136, %s138
      %p145 = scmp.eq.s32.totalorder %s23, 1
      %p146 = por %p144, %p145
      %p147 = scmp.ne.s32.totalorder %s138, %s139
      %p148 = scmp.eq.s32.totalorder %s23, 0
      %p149 = por %p147, %p148
      %p150 = scmp.ne.s32.totalorder %s138, %s139
      %p151 = scmp.eq.s32.totalorder %s24, 1
      %p152 = por %p150, %p151
      %p154 = scmp.ne.s32.totalorder %s139, %s153
      %p155 = scmp.eq.s32.totalorder %s24, 0
      %p156 = por %p154, %p155
      %s157 = ssub.s32 %s18, %s25
      %p158 = scmp.eq.s32.totalorder %s157, 0
      %s160 = sadd.s32 %s159, 1
      %s161 = scalar_select %p158, %s159, %s160
      %p164 = pneg %p158
      %p165 = scmp.eq.s32.totalorder %s18, 1
      %p166 = por %p164, %p165
      %p167 = scmp.ne.s32.totalorder %s159, %s162
      %p168 = scmp.eq.s32.totalorder %s18, 0
      %p169 = por %p167, %p168
      %p170 = scmp.ne.s32.totalorder %s159, %s162
      %p171 = scmp.eq.s32.totalorder %s23, 1
      %p172 = por %p170, %p171
      %p173 = scmp.ne.s32.totalorder %s162, %s163
      %p174 = scmp.eq.s32.totalorder %s23, 0
      %p175 = por %p173, %p174
      %p176 = scmp.ne.s32.totalorder %s162, %s163
      %p177 = scmp.eq.s32.totalorder %s24, 1
      %p178 = por %p176, %p177
      %p180 = scmp.ne.s32.totalorder %s163, %s179
      %p181 = scmp.eq.s32.totalorder %s24, 0
      %p182 = por %p180, %p181
      %p183 = scmp.le.s32.totalorder 1, %s18
      %p184 = scmp.lt.s32.totalorder %s18, 3
      %p185 = pnand %p183, %p184
      %p186 = pneg %p185
      // Predicated region
      $region9: #{tpu_custom_call.1} parent=5 // pred_check
        _
      $region10: #{tpu_custom_call.1} parent=5 // pred_check_branch
        %188 = sbr.rel (%p185) target = $region12
      $region11: #{tpu_custom_call.1} parent=5 // pred_region
        %s189 = ssub.s32 %s18, 1
        // Predicated region
        $region13: #{tpu_custom_call.1} parent=11 // pred_check
          %p190 = pneg %p65
        $region14: #{tpu_custom_call.1} parent=11 // pred_check_branch
          %192 = sbr.rel (%p190) target = $region16
        $region15: #{tpu_custom_call.1} parent=11 // pred_region
          _
        $region16: #{tpu_custom_call.1} parent=11 // pred_fallthru
          _
        // Predicated region
        $region17: #{tpu_custom_call.1} parent=11 // pred_check
          %p193 = pneg %p86
        $region18: #{tpu_custom_call.1} parent=11 // pred_check_branch
          %195 = sbr.rel (%p193) target = $region20
        $region19: #{tpu_custom_call.1} parent=11 // pred_region
          _
        $region20: #{tpu_custom_call.1} parent=11 // pred_fallthru
          _
        // Predicated region
        $region21: #{tpu_custom_call.1} parent=11 // pred_check
          %p196 = pneg %p107
        $region22: #{tpu_custom_call.1} parent=11 // pred_check_branch
          %198 = sbr.rel (%p196) target = $region24
        $region23: #{tpu_custom_call.1} parent=11 // pred_region
          _
        $region24: #{tpu_custom_call.1} parent=11 // pred_fallthru
          _
        // Predicated region
        $region25: #{tpu_custom_call.1} parent=11 // pred_check
          %p199 = pneg %p128
        $region26: #{tpu_custom_call.1} parent=11 // pred_check_branch
          %201 = sbr.rel (%p199) target = $region28
        $region27: #{tpu_custom_call.1} parent=11 // pred_region
          _
        $region28: #{tpu_custom_call.1} parent=11 // pred_fallthru
          _
        // Predicated region
        $region29: #{tpu_custom_call.1} parent=11 // pred_check
          %p202 = pneg %p149
        $region30: #{tpu_custom_call.1} parent=11 // pred_check_branch
          %204 = sbr.rel (%p202) target = $region32
        $region31: #{tpu_custom_call.1} parent=11 // pred_region
          _
        $region32: #{tpu_custom_call.1} parent=11 // pred_fallthru
          _
      $region12: #{tpu_custom_call.1} parent=5 // pred_fallthru
        _
      %p205 = scmp.lt.s32.totalorder %s18, 2
      // Predicated region
      $region33: #{tpu_custom_call.1} parent=5 // pred_check
        %p206 = pneg %p205
      $region34: #{tpu_custom_call.1} parent=5 // pred_check_branch
        %208 = sbr.rel (%p206) target = $region36
      $region35: #{tpu_custom_call.1} parent=5 // pred_region
        // Predicated region
        $region37: #{tpu_custom_call.1} parent=35 // pred_check
          %p209 = pneg %p38
        $region38: #{tpu_custom_call.1} parent=35 // pred_check_branch
          %211 = sbr.rel (%p209) target = $region40
        $region39: #{tpu_custom_call.1} parent=35 // pred_region
          %s212 = sand.u32 %s28, 1
          %s213 = scalar_lea.sflag [#allocation3], %s212
          %s214 = sand.u32 %s28, 1
          %s215 = smul.addr %s214, 768
          %s216 = scalar_lea.vmem [#allocation2], %s215
          %s217 = smul.u32 16, %s18
          %s219 = ssub.s32 12288, 12288
          %220 = vsyncadd %s213, %s219
          %s221 = smul.addr %s217, 6
          %s222 = smul.addr %s221, 128
          %s223 = scalar_lea.hbm %s0, %s222
          %s224 = sshll.u32 %s216, 4
          %s225 = int_to_ptr.vmem [resolvable:$true] %s224
          %230 = dma.hbm_to_vmem [thread:$0]  %s223, 12288, %s225, %s213, 128, 128, 8
        $region40: #{tpu_custom_call.1} parent=35 // pred_fallthru
          _
      $region36: #{tpu_custom_call.1} parent=5 // pred_fallthru
        _
      %p231 = scmp.le.s32.totalorder 1, %s18
      %p232 = scmp.lt.s32.totalorder %s18, 3
      %p233 = pnand %p231, %p232
      %p234 = pneg %p233
      // Predicated region
      $region41: #{tpu_custom_call.1} parent=5 // pred_check
        _
      $region42: #{tpu_custom_call.1} parent=5 // pred_check_branch
        %236 = sbr.rel (%p233) target = $region44
      $region43: #{tpu_custom_call.1} parent=5 // pred_region
        %s237 = ssub.s32 %s18, 1
        %s238 = sand.u32 %s31, 1
        %s239 = scalar_lea.sflag [#allocation3], %s238
        %s240 = sand.u32 %s31, 1
        %s241 = smul.addr %s240, 768
        %s242 = scalar_lea.vmem [#allocation2], %s241
        // Predicated region
        $region45: #{tpu_custom_call.1} parent=43 // pred_check
          %p243 = pneg %p44
        $region46: #{tpu_custom_call.1} parent=43 // pred_check_branch
          %245 = sbr.rel (%p243) target = $region48
        $region47: #{tpu_custom_call.1} parent=43 // pred_region
          %246 = dma.done %s239, 12288
        $region48: #{tpu_custom_call.1} parent=43 // pred_fallthru
          _
        %s247 = sand.u32 %s31, 1
        %s248 = scalar_lea.sflag [#allocation3], %s247
        %s249 = sand.u32 %s31, 1
        %s250 = smul.addr %s249, 768
        %s251 = scalar_lea.vmem [#allocation2], %s250
        %p252 = pneg %p44
        %p253 = pneg %p41
        %p254 = pneg %p65
        %p255 = pneg %p62
        %p256 = pneg %p86
        %p257 = pneg %p83
        %p258 = pneg %p107
        %p259 = pneg %p104
        %p260 = pneg %p128
        %p261 = pneg %p125
        %p262 = pneg %p149
        %p263 = pneg %p146
        %p264 = pneg %p175
        %p265 = pneg %p172
        %s266 = sand.u32 %s162, 1
        %s267 = scalar_lea.sflag [#allocation4], %s266
        %s268 = sand.u32 %s162, 1
        %s269 = smul.addr %s268, 768
        %s270 = scalar_lea.vmem [#allocation5], %s269
        %s271 = smul.u32 16, %s23
        %s272 = smul.u32 16, %s23
        %v273 = vld [vmem:[%s242] sm:$0xff]
        %v274 = vld [vmem:[%s242 + $0x8] sm:$0xff]
        %v275 = vld [vmem:[%s242 + $0x10] sm:$0xff]
        %v276 = vld [vmem:[%s242 + $0x18] sm:$0xff]
        %v277 = vld [vmem:[%s242 + $0x20] sm:$0xff]
        %v278 = vld [vmem:[%s242 + $0x28] sm:$0xff]
        %v279 = vld [vmem:[%s242 + $0x30] sm:$0xff]
        %v280 = vld [vmem:[%s242 + $0x38] sm:$0xff]
        %v281 = vld [vmem:[%s242 + $0x40] sm:$0xff]
        %v282 = vld [vmem:[%s242 + $0x48] sm:$0xff]
        %v283 = vld [vmem:[%s242 + $0x50] sm:$0xff]
        %v284 = vld [vmem:[%s242 + $0x58] sm:$0xff]
        %v285 = vld [vmem:[%s242 + $0x60] sm:$0xff]
        %v286 = vld [vmem:[%s242 + $0x68] sm:$0xff]
        %v287 = vld [vmem:[%s242 + $0x70] sm:$0xff]
        %v288 = vld [vmem:[%s242 + $0x78] sm:$0xff]
        %v289 = vld [vmem:[%s242 + $0x80] sm:$0xff]
        %v290 = vld [vmem:[%s242 + $0x88] sm:$0xff]
        %v291 = vld [vmem:[%s242 + $0x90] sm:$0xff]
        %v292 = vld [vmem:[%s242 + $0x98] sm:$0xff]
        %v293 = vld [vmem:[%s242 + $0xa0] sm:$0xff]
        %v294 = vld [vmem:[%s242 + $0xa8] sm:$0xff]
        %v295 = vld [vmem:[%s242 + $0xb0] sm:$0xff]
        %v296 = vld [vmem:[%s242 + $0xb8] sm:$0xff]
        %v297 = vld [vmem:[%s242 + $0xc0] sm:$0xff]
        %v298 = vld [vmem:[%s242 + $0xc8] sm:$0xff]
        %v299 = vld [vmem:[%s242 + $0xd0] sm:$0xff]
        %v300 = vld [vmem:[%s242 + $0xd8] sm:$0xff]
        %v301 = vld [vmem:[%s242 + $0xe0] sm:$0xff]
        %v302 = vld [vmem:[%s242 + $0xe8] sm:$0xff]
        %v303 = vld [vmem:[%s242 + $0xf0] sm:$0xff]
        %v304 = vld [vmem:[%s242 + $0xf8] sm:$0xff]
        %v305 = vld [vmem:[%s242 + $0x100] sm:$0xff]
        %v306 = vld [vmem:[%s242 + $0x108] sm:$0xff]
        %v307 = vld [vmem:[%s242 + $0x110] sm:$0xff]
        %v308 = vld [vmem:[%s242 + $0x118] sm:$0xff]
        %v309 = vld [vmem:[%s242 + $0x120] sm:$0xff]
        %v310 = vld [vmem:[%s242 + $0x128] sm:$0xff]
        %v311 = vld [vmem:[%s242 + $0x130] sm:$0xff]
        %v312 = vld [vmem:[%s242 + $0x138] sm:$0xff]
        %v313 = vld [vmem:[%s242 + $0x140] sm:$0xff]
        %v314 = vld [vmem:[%s242 + $0x148] sm:$0xff]
        %v315 = vld [vmem:[%s242 + $0x150] sm:$0xff]
        %v316 = vld [vmem:[%s242 + $0x158] sm:$0xff]
        %v317 = vld [vmem:[%s242 + $0x160] sm:$0xff]
        %v318 = vld [vmem:[%s242 + $0x168] sm:$0xff]
        %v319 = vld [vmem:[%s242 + $0x170] sm:$0xff]
        %v320 = vld [vmem:[%s242 + $0x178] sm:$0xff]
        %v321 = vld [vmem:[%s242 + $0x180] sm:$0xff]
        %v322 = vld [vmem:[%s242 + $0x188] sm:$0xff]
        %v323 = vld [vmem:[%s242 + $0x190] sm:$0xff]
        %v324 = vld [vmem:[%s242 + $0x198] sm:$0xff]
        %v325 = vld [vmem:[%s242 + $0x1a0] sm:$0xff]
        %v326 = vld [vmem:[%s242 + $0x1a8] sm:$0xff]
        %v327 = vld [vmem:[%s242 + $0x1b0] sm:$0xff]
        %v328 = vld [vmem:[%s242 + $0x1b8] sm:$0xff]
        %v329 = vld [vmem:[%s242 + $0x1c0] sm:$0xff]
        %v330 = vld [vmem:[%s242 + $0x1c8] sm:$0xff]
        %v331 = vld [vmem:[%s242 + $0x1d0] sm:$0xff]
        %v332 = vld [vmem:[%s242 + $0x1d8] sm:$0xff]
        %v333 = vld [vmem:[%s242 + $0x1e0] sm:$0xff]
        %v334 = vld [vmem:[%s242 + $0x1e8] sm:$0xff]
        %v335 = vld [vmem:[%s242 + $0x1f0] sm:$0xff]
        %v336 = vld [vmem:[%s242 + $0x1f8] sm:$0xff]
        %v337 = vld [vmem:[%s242 + $0x200] sm:$0xff]
        %v338 = vld [vmem:[%s242 + $0x208] sm:$0xff]
        %v339 = vld [vmem:[%s242 + $0x210] sm:$0xff]
        %v340 = vld [vmem:[%s242 + $0x218] sm:$0xff]
        %v341 = vld [vmem:[%s242 + $0x220] sm:$0xff]
        %v342 = vld [vmem:[%s242 + $0x228] sm:$0xff]
        %v343 = vld [vmem:[%s242 + $0x230] sm:$0xff]
        %v344 = vld [vmem:[%s242 + $0x238] sm:$0xff]
        %v345 = vld [vmem:[%s242 + $0x240] sm:$0xff]
        %v346 = vld [vmem:[%s242 + $0x248] sm:$0xff]
        %v347 = vld [vmem:[%s242 + $0x250] sm:$0xff]
        %v348 = vld [vmem:[%s242 + $0x258] sm:$0xff]
        %v349 = vld [vmem:[%s242 + $0x260] sm:$0xff]
        %v350 = vld [vmem:[%s242 + $0x268] sm:$0xff]
        %v351 = vld [vmem:[%s242 + $0x270] sm:$0xff]
        %v352 = vld [vmem:[%s242 + $0x278] sm:$0xff]
        %v353 = vld [vmem:[%s242 + $0x280] sm:$0xff]
        %v354 = vld [vmem:[%s242 + $0x288] sm:$0xff]
        %v355 = vld [vmem:[%s242 + $0x290] sm:$0xff]
        %v356 = vld [vmem:[%s242 + $0x298] sm:$0xff]
        %v357 = vld [vmem:[%s242 + $0x2a0] sm:$0xff]
        %v358 = vld [vmem:[%s242 + $0x2a8] sm:$0xff]
        %v359 = vld [vmem:[%s242 + $0x2b0] sm:$0xff]
        %v360 = vld [vmem:[%s242 + $0x2b8] sm:$0xff]
        %v361 = vld [vmem:[%s242 + $0x2c0] sm:$0xff]
        %v362 = vld [vmem:[%s242 + $0x2c8] sm:$0xff]
        %v363 = vld [vmem:[%s242 + $0x2d0] sm:$0xff]
        %v364 = vld [vmem:[%s242 + $0x2d8] sm:$0xff]
        %v365 = vld [vmem:[%s242 + $0x2e0] sm:$0xff]
        %v366 = vld [vmem:[%s242 + $0x2e8] sm:$0xff]
        %v367 = vld [vmem:[%s242 + $0x2f0] sm:$0xff]
        %v368 = vld [vmem:[%s242 + $0x2f8] sm:$0xff]
        %369 = vadd.xlane.f32.xlu0 %v273
        %v370 = vpop.xlane.xlu0 %369
        %371 = vadd.xlane.f32.xlu0 %v274
        %v372 = vpop.xlane.xlu0 %371
        %373 = vadd.xlane.f32.xlu0 %v275
        %v374 = vpop.xlane.xlu0 %373
        %375 = vadd.xlane.f32.xlu0 %v276
        %v376 = vpop.xlane.xlu0 %375
        %377 = vadd.xlane.f32.xlu0 %v277
        %v378 = vpop.xlane.xlu0 %377
        %379 = vadd.xlane.f32.xlu0 %v278
        %v380 = vpop.xlane.xlu0 %379
        %381 = vadd.xlane.f32.xlu0 %v279
        %v382 = vpop.xlane.xlu0 %381
        %383 = vadd.xlane.f32.xlu0 %v280
        %v384 = vpop.xlane.xlu0 %383
        %385 = vadd.xlane.f32.xlu0 %v281
        %v386 = vpop.xlane.xlu0 %385
        %387 = vadd.xlane.f32.xlu0 %v282
        %v388 = vpop.xlane.xlu0 %387
        %389 = vadd.xlane.f32.xlu0 %v283
        %v390 = vpop.xlane.xlu0 %389
        %391 = vadd.xlane.f32.xlu0 %v284
        %v392 = vpop.xlane.xlu0 %391
        %393 = vadd.xlane.f32.xlu0 %v285
        %v394 = vpop.xlane.xlu0 %393
        %395 = vadd.xlane.f32.xlu0 %v286
        %v396 = vpop.xlane.xlu0 %395
        %397 = vadd.xlane.f32.xlu0 %v287
        %v398 = vpop.xlane.xlu0 %397
        %399 = vadd.xlane.f32.xlu0 %v288
        %v400 = vpop.xlane.xlu0 %399
        %401 = vadd.xlane.f32.xlu0 %v289
        %v402 = vpop.xlane.xlu0 %401
        %403 = vadd.xlane.f32.xlu0 %v290
        %v404 = vpop.xlane.xlu0 %403
        %405 = vadd.xlane.f32.xlu0 %v291
        %v406 = vpop.xlane.xlu0 %405
        %407 = vadd.xlane.f32.xlu0 %v292
        %v408 = vpop.xlane.xlu0 %407
        %409 = vadd.xlane.f32.xlu0 %v293
        %v410 = vpop.xlane.xlu0 %409
        %411 = vadd.xlane.f32.xlu0 %v294
        %v412 = vpop.xlane.xlu0 %411
        %413 = vadd.xlane.f32.xlu0 %v295
        %v414 = vpop.xlane.xlu0 %413
        %415 = vadd.xlane.f32.xlu0 %v296
        %v416 = vpop.xlane.xlu0 %415
        %417 = vadd.xlane.f32.xlu0 %v297
        %v418 = vpop.xlane.xlu0 %417
        %419 = vadd.xlane.f32.xlu0 %v298
        %v420 = vpop.xlane.xlu0 %419
        %421 = vadd.xlane.f32.xlu0 %v299
        %v422 = vpop.xlane.xlu0 %421
        %423 = vadd.xlane.f32.xlu0 %v300
        %v424 = vpop.xlane.xlu0 %423
        %425 = vadd.xlane.f32.xlu0 %v301
        %v426 = vpop.xlane.xlu0 %425
        %427 = vadd.xlane.f32.xlu0 %v302
        %v428 = vpop.xlane.xlu0 %427
        %429 = vadd.xlane.f32.xlu0 %v303
        %v430 = vpop.xlane.xlu0 %429
        %431 = vadd.xlane.f32.xlu0 %v304
        %v432 = vpop.xlane.xlu0 %431
        %433 = vadd.xlane.f32.xlu0 %v305
        %v434 = vpop.xlane.xlu0 %433
        %435 = vadd.xlane.f32.xlu0 %v306
        %v436 = vpop.xlane.xlu0 %435
        %437 = vadd.xlane.f32.xlu0 %v307
        %v438 = vpop.xlane.xlu0 %437
        %439 = vadd.xlane.f32.xlu0 %v308
        %v440 = vpop.xlane.xlu0 %439
        %441 = vadd.xlane.f32.xlu0 %v309
        %v442 = vpop.xlane.xlu0 %441
        %443 = vadd.xlane.f32.xlu0 %v310
        %v444 = vpop.xlane.xlu0 %443
        %445 = vadd.xlane.f32.xlu0 %v311
        %v446 = vpop.xlane.xlu0 %445
        %447 = vadd.xlane.f32.xlu0 %v312
        %v448 = vpop.xlane.xlu0 %447
        %449 = vadd.xlane.f32.xlu0 %v313
        %v450 = vpop.xlane.xlu0 %449
        %451 = vadd.xlane.f32.xlu0 %v314
        %v452 = vpop.xlane.xlu0 %451
        %453 = vadd.xlane.f32.xlu0 %v315
        %v454 = vpop.xlane.xlu0 %453
        %455 = vadd.xlane.f32.xlu0 %v316
        %v456 = vpop.xlane.xlu0 %455
        %457 = vadd.xlane.f32.xlu0 %v317
        %v458 = vpop.xlane.xlu0 %457
        %459 = vadd.xlane.f32.xlu0 %v318
        %v460 = vpop.xlane.xlu0 %459
        %461 = vadd.xlane.f32.xlu0 %v319
        %v462 = vpop.xlane.xlu0 %461
        %463 = vadd.xlane.f32.xlu0 %v320
        %v464 = vpop.xlane.xlu0 %463
        %465 = vadd.xlane.f32.xlu0 %v321
        %v466 = vpop.xlane.xlu0 %465
        %467 = vadd.xlane.f32.xlu0 %v322
        %v468 = vpop.xlane.xlu0 %467
        %469 = vadd.xlane.f32.xlu0 %v323
        %v470 = vpop.xlane.xlu0 %469
        %471 = vadd.xlane.f32.xlu0 %v324
        %v472 = vpop.xlane.xlu0 %471
        %473 = vadd.xlane.f32.xlu0 %v325
        %v474 = vpop.xlane.xlu0 %473
        %475 = vadd.xlane.f32.xlu0 %v326
        %v476 = vpop.xlane.xlu0 %475
        %477 = vadd.xlane.f32.xlu0 %v327
        %v478 = vpop.xlane.xlu0 %477
        %479 = vadd.xlane.f32.xlu0 %v328
        %v480 = vpop.xlane.xlu0 %479
        %481 = vadd.xlane.f32.xlu0 %v329
        %v482 = vpop.xlane.xlu0 %481
        %483 = vadd.xlane.f32.xlu0 %v330
        %v484 = vpop.xlane.xlu0 %483
        %485 = vadd.xlane.f32.xlu0 %v331
        %v486 = vpop.xlane.xlu0 %485
        %487 = vadd.xlane.f32.xlu0 %v332
        %v488 = vpop.xlane.xlu0 %487
        %489 = vadd.xlane.f32.xlu0 %v333
        %v490 = vpop.xlane.xlu0 %489
        %491 = vadd.xlane.f32.xlu0 %v334
        %v492 = vpop.xlane.xlu0 %491
        %493 = vadd.xlane.f32.xlu0 %v335
        %v494 = vpop.xlane.xlu0 %493
        %495 = vadd.xlane.f32.xlu0 %v336
        %v496 = vpop.xlane.xlu0 %495
        %497 = vadd.xlane.f32.xlu0 %v337
        %v498 = vpop.xlane.xlu0 %497
        %499 = vadd.xlane.f32.xlu0 %v338
        %v500 = vpop.xlane.xlu0 %499
        %501 = vadd.xlane.f32.xlu0 %v339
        %v502 = vpop.xlane.xlu0 %501
        %503 = vadd.xlane.f32.xlu0 %v340
        %v504 = vpop.xlane.xlu0 %503
        %505 = vadd.xlane.f32.xlu0 %v341
        %v506 = vpop.xlane.xlu0 %505
        %507 = vadd.xlane.f32.xlu0 %v342
        %v508 = vpop.xlane.xlu0 %507
        %509 = vadd.xlane.f32.xlu0 %v343
        %v510 = vpop.xlane.xlu0 %509
        %511 = vadd.xlane.f32.xlu0 %v344
        %v512 = vpop.xlane.xlu0 %511
        %513 = vadd.xlane.f32.xlu0 %v345
        %v514 = vpop.xlane.xlu0 %513
        %515 = vadd.xlane.f32.xlu0 %v346
        %v516 = vpop.xlane.xlu0 %515
        %517 = vadd.xlane.f32.xlu0 %v347
        %v518 = vpop.xlane.xlu0 %517
        %519 = vadd.xlane.f32.xlu0 %v348
        %v520 = vpop.xlane.xlu0 %519
        %521 = vadd.xlane.f32.xlu0 %v349
        %v522 = vpop.xlane.xlu0 %521
        %523 = vadd.xlane.f32.xlu0 %v350
        %v524 = vpop.xlane.xlu0 %523
        %525 = vadd.xlane.f32.xlu0 %v351
        %v526 = vpop.xlane.xlu0 %525
        %527 = vadd.xlane.f32.xlu0 %v352
        %v528 = vpop.xlane.xlu0 %527
        %529 = vadd.xlane.f32.xlu0 %v353
        %v530 = vpop.xlane.xlu0 %529
        %531 = vadd.xlane.f32.xlu0 %v354
        %v532 = vpop.xlane.xlu0 %531
        %533 = vadd.xlane.f32.xlu0 %v355
        %v534 = vpop.xlane.xlu0 %533
        %535 = vadd.xlane.f32.xlu0 %v356
        %v536 = vpop.xlane.xlu0 %535
        %537 = vadd.xlane.f32.xlu0 %v357
        %v538 = vpop.xlane.xlu0 %537
        %539 = vadd.xlane.f32.xlu0 %v358
        %v540 = vpop.xlane.xlu0 %539
        %541 = vadd.xlane.f32.xlu0 %v359
        %v542 = vpop.xlane.xlu0 %541
        %543 = vadd.xlane.f32.xlu0 %v360
        %v544 = vpop.xlane.xlu0 %543
        %545 = vadd.xlane.f32.xlu0 %v361
        %v546 = vpop.xlane.xlu0 %545
        %547 = vadd.xlane.f32.xlu0 %v362
        %v548 = vpop.xlane.xlu0 %547
        %549 = vadd.xlane.f32.xlu0 %v363
        %v550 = vpop.xlane.xlu0 %549
        %551 = vadd.xlane.f32.xlu0 %v364
        %v552 = vpop.xlane.xlu0 %551
        %553 = vadd.xlane.f32.xlu0 %v365
        %v554 = vpop.xlane.xlu0 %553
        %555 = vadd.xlane.f32.xlu0 %v366
        %v556 = vpop.xlane.xlu0 %555
        %557 = vadd.xlane.f32.xlu0 %v367
        %v558 = vpop.xlane.xlu0 %557
        %559 = vadd.xlane.f32.xlu0 %v368
        %v560 = vpop.xlane.xlu0 %559
        %v561 = vrcp.pop 128.0
        %v562 = vmul.f32 %v370, %v561
        %v563 = vmul.f32 %v372, %v561
        %v564 = vmul.f32 %v374, %v561
        %v565 = vmul.f32 %v376, %v561
        %v566 = vmul.f32 %v378, %v561
        %v567 = vmul.f32 %v380, %v561
        %v568 = vmul.f32 %v382, %v561
        %v569 = vmul.f32 %v384, %v561
        %v570 = vmul.f32 %v386, %v561
        %v571 = vmul.f32 %v388, %v561
        %v572 = vmul.f32 %v390, %v561
        %v573 = vmul.f32 %v392, %v561
        %v574 = vmul.f32 %v394, %v561
        %v575 = vmul.f32 %v396, %v561
        %v576 = vmul.f32 %v398, %v561
        %v577 = vmul.f32 %v400, %v561
        %v578 = vmul.f32 %v402, %v561
        %v579 = vmul.f32 %v404, %v561
        %v580 = vmul.f32 %v406, %v561
        %v581 = vmul.f32 %v408, %v561
        %v582 = vmul.f32 %v410, %v561
        %v583 = vmul.f32 %v412, %v561
        %v584 = vmul.f32 %v414, %v561
        %v585 = vmul.f32 %v416, %v561
        %v586 = vmul.f32 %v418, %v561
        %v587 = vmul.f32 %v420, %v561
        %v588 = vmul.f32 %v422, %v561
        %v589 = vmul.f32 %v424, %v561
        %v590 = vmul.f32 %v426, %v561
        %v591 = vmul.f32 %v428, %v561
        %v592 = vmul.f32 %v430, %v561
        %v593 = vmul.f32 %v432, %v561
        %v594 = vmul.f32 %v434, %v561
        %v595 = vmul.f32 %v436, %v561
        %v596 = vmul.f32 %v438, %v561
        %v597 = vmul.f32 %v440, %v561
        %v598 = vmul.f32 %v442, %v561
        %v599 = vmul.f32 %v444, %v561
        %v600 = vmul.f32 %v446, %v561
        %v601 = vmul.f32 %v448, %v561
        %v602 = vmul.f32 %v450, %v561
        %v603 = vmul.f32 %v452, %v561
        %v604 = vmul.f32 %v454, %v561
        %v605 = vmul.f32 %v456, %v561
        %v606 = vmul.f32 %v458, %v561
        %v607 = vmul.f32 %v460, %v561
        %v608 = vmul.f32 %v462, %v561
        %v609 = vmul.f32 %v464, %v561
        %v610 = vmul.f32 %v466, %v561
        %v611 = vmul.f32 %v468, %v561
        %v612 = vmul.f32 %v470, %v561
        %v613 = vmul.f32 %v472, %v561
        %v614 = vmul.f32 %v474, %v561
        %v615 = vmul.f32 %v476, %v561
        %v616 = vmul.f32 %v478, %v561
        %v617 = vmul.f32 %v480, %v561
        %v618 = vmul.f32 %v482, %v561
        %v619 = vmul.f32 %v484, %v561
        %v620 = vmul.f32 %v486, %v561
        %v621 = vmul.f32 %v488, %v561
        %v622 = vmul.f32 %v490, %v561
        %v623 = vmul.f32 %v492, %v561
        %v624 = vmul.f32 %v494, %v561
        %v625 = vmul.f32 %v496, %v561
        %v626 = vmul.f32 %v498, %v561
        %v627 = vmul.f32 %v500, %v561
        %v628 = vmul.f32 %v502, %v561
        %v629 = vmul.f32 %v504, %v561
        %v630 = vmul.f32 %v506, %v561
        %v631 = vmul.f32 %v508, %v561
        %v632 = vmul.f32 %v510, %v561
        %v633 = vmul.f32 %v512, %v561
        %v634 = vmul.f32 %v514, %v561
        %v635 = vmul.f32 %v516, %v561
        %v636 = vmul.f32 %v518, %v561
        %v637 = vmul.f32 %v520, %v561
        %v638 = vmul.f32 %v522, %v561
        %v639 = vmul.f32 %v524, %v561
        %v640 = vmul.f32 %v526, %v561
        %v641 = vmul.f32 %v528, %v561
        %v642 = vmul.f32 %v530, %v561
        %v643 = vmul.f32 %v532, %v561
        %v644 = vmul.f32 %v534, %v561
        %v645 = vmul.f32 %v536, %v561
        %v646 = vmul.f32 %v538, %v561
        %v647 = vmul.f32 %v540, %v561
        %v648 = vmul.f32 %v542, %v561
        %v649 = vmul.f32 %v544, %v561
        %v650 = vmul.f32 %v546, %v561
        %v651 = vmul.f32 %v548, %v561
        %v652 = vmul.f32 %v550, %v561
        %v653 = vmul.f32 %v552, %v561
        %v654 = vmul.f32 %v554, %v561
        %v655 = vmul.f32 %v556, %v561
        %v656 = vmul.f32 %v558, %v561
        %v657 = vmul.f32 %v560, %v561
        %658 = vmax.xlane.f32.xlu0 %v273
        %v659 = vpop.xlane.xlu0 %658
        %660 = vmax.xlane.f32.xlu0 %v274
        %v661 = vpop.xlane.xlu0 %660
        %662 = vmax.xlane.f32.xlu0 %v275
        %v663 = vpop.xlane.xlu0 %662
        %664 = vmax.xlane.f32.xlu0 %v276
        %v665 = vpop.xlane.xlu0 %664
        %666 = vmax.xlane.f32.xlu0 %v277
        %v667 = vpop.xlane.xlu0 %666
        %668 = vmax.xlane.f32.xlu0 %v278
        %v669 = vpop.xlane.xlu0 %668
        %670 = vmax.xlane.f32.xlu0 %v279
        %v671 = vpop.xlane.xlu0 %670
        %672 = vmax.xlane.f32.xlu0 %v280
        %v673 = vpop.xlane.xlu0 %672
        %674 = vmax.xlane.f32.xlu0 %v281
        %v675 = vpop.xlane.xlu0 %674
        %676 = vmax.xlane.f32.xlu0 %v282
        %v677 = vpop.xlane.xlu0 %676
        %678 = vmax.xlane.f32.xlu0 %v283
        %v679 = vpop.xlane.xlu0 %678
        %680 = vmax.xlane.f32.xlu0 %v284
        %v681 = vpop.xlane.xlu0 %680
        %682 = vmax.xlane.f32.xlu0 %v285
        %v683 = vpop.xlane.xlu0 %682
        %684 = vmax.xlane.f32.xlu0 %v286
        %v685 = vpop.xlane.xlu0 %684
        %686 = vmax.xlane.f32.xlu0 %v287
        %v687 = vpop.xlane.xlu0 %686
        %688 = vmax.xlane.f32.xlu0 %v288
        %v689 = vpop.xlane.xlu0 %688
        %690 = vmax.xlane.f32.xlu0 %v289
        %v691 = vpop.xlane.xlu0 %690
        %692 = vmax.xlane.f32.xlu0 %v290
        %v693 = vpop.xlane.xlu0 %692
        %694 = vmax.xlane.f32.xlu0 %v291
        %v695 = vpop.xlane.xlu0 %694
        %696 = vmax.xlane.f32.xlu0 %v292
        %v697 = vpop.xlane.xlu0 %696
        %698 = vmax.xlane.f32.xlu0 %v293
        %v699 = vpop.xlane.xlu0 %698
        %700 = vmax.xlane.f32.xlu0 %v294
        %v701 = vpop.xlane.xlu0 %700
        %702 = vmax.xlane.f32.xlu0 %v295
        %v703 = vpop.xlane.xlu0 %702
        %704 = vmax.xlane.f32.xlu0 %v296
        %v705 = vpop.xlane.xlu0 %704
        %706 = vmax.xlane.f32.xlu0 %v297
        %v707 = vpop.xlane.xlu0 %706
        %708 = vmax.xlane.f32.xlu0 %v298
        %v709 = vpop.xlane.xlu0 %708
        %710 = vmax.xlane.f32.xlu0 %v299
        %v711 = vpop.xlane.xlu0 %710
        %712 = vmax.xlane.f32.xlu0 %v300
        %v713 = vpop.xlane.xlu0 %712
        %714 = vmax.xlane.f32.xlu0 %v301
        %v715 = vpop.xlane.xlu0 %714
        %716 = vmax.xlane.f32.xlu0 %v302
        %v717 = vpop.xlane.xlu0 %716
        %718 = vmax.xlane.f32.xlu0 %v303
        %v719 = vpop.xlane.xlu0 %718
        %720 = vmax.xlane.f32.xlu0 %v304
        %v721 = vpop.xlane.xlu0 %720
        %722 = vmax.xlane.f32.xlu0 %v305
        %v723 = vpop.xlane.xlu0 %722
        %724 = vmax.xlane.f32.xlu0 %v306
        %v725 = vpop.xlane.xlu0 %724
        %726 = vmax.xlane.f32.xlu0 %v307
        %v727 = vpop.xlane.xlu0 %726
        %728 = vmax.xlane.f32.xlu0 %v308
        %v729 = vpop.xlane.xlu0 %728
        %730 = vmax.xlane.f32.xlu0 %v309
        %v731 = vpop.xlane.xlu0 %730
        %732 = vmax.xlane.f32.xlu0 %v310
        %v733 = vpop.xlane.xlu0 %732
        %734 = vmax.xlane.f32.xlu0 %v311
        %v735 = vpop.xlane.xlu0 %734
        %736 = vmax.xlane.f32.xlu0 %v312
        %v737 = vpop.xlane.xlu0 %736
        %738 = vmax.xlane.f32.xlu0 %v313
        %v739 = vpop.xlane.xlu0 %738
        %740 = vmax.xlane.f32.xlu0 %v314
        %v741 = vpop.xlane.xlu0 %740
        %742 = vmax.xlane.f32.xlu0 %v315
        %v743 = vpop.xlane.xlu0 %742
        %744 = vmax.xlane.f32.xlu0 %v316
        %v745 = vpop.xlane.xlu0 %744
        %746 = vmax.xlane.f32.xlu0 %v317
        %v747 = vpop.xlane.xlu0 %746
        %748 = vmax.xlane.f32.xlu0 %v318
        %v749 = vpop.xlane.xlu0 %748
        %750 = vmax.xlane.f32.xlu0 %v319
        %v751 = vpop.xlane.xlu0 %750
        %752 = vmax.xlane.f32.xlu0 %v320
        %v753 = vpop.xlane.xlu0 %752
        %754 = vmax.xlane.f32.xlu0 %v321
        %v755 = vpop.xlane.xlu0 %754
        %756 = vmax.xlane.f32.xlu0 %v322
        %v757 = vpop.xlane.xlu0 %756
        %758 = vmax.xlane.f32.xlu0 %v323
        %v759 = vpop.xlane.xlu0 %758
        %760 = vmax.xlane.f32.xlu0 %v324
        %v761 = vpop.xlane.xlu0 %760
        %762 = vmax.xlane.f32.xlu0 %v325
        %v763 = vpop.xlane.xlu0 %762
        %764 = vmax.xlane.f32.xlu0 %v326
        %v765 = vpop.xlane.xlu0 %764
        %766 = vmax.xlane.f32.xlu0 %v327
        %v767 = vpop.xlane.xlu0 %766
        %768 = vmax.xlane.f32.xlu0 %v328
        %v769 = vpop.xlane.xlu0 %768
        %770 = vmax.xlane.f32.xlu0 %v329
        %v771 = vpop.xlane.xlu0 %770
        %772 = vmax.xlane.f32.xlu0 %v330
        %v773 = vpop.xlane.xlu0 %772
        %774 = vmax.xlane.f32.xlu0 %v331
        %v775 = vpop.xlane.xlu0 %774
        %776 = vmax.xlane.f32.xlu0 %v332
        %v777 = vpop.xlane.xlu0 %776
        %778 = vmax.xlane.f32.xlu0 %v333
        %v779 = vpop.xlane.xlu0 %778
        %780 = vmax.xlane.f32.xlu0 %v334
        %v781 = vpop.xlane.xlu0 %780
        %782 = vmax.xlane.f32.xlu0 %v335
        %v783 = vpop.xlane.xlu0 %782
        %784 = vmax.xlane.f32.xlu0 %v336
        %v785 = vpop.xlane.xlu0 %784
        %786 = vmax.xlane.f32.xlu0 %v337
        %v787 = vpop.xlane.xlu0 %786
        %788 = vmax.xlane.f32.xlu0 %v338
        %v789 = vpop.xlane.xlu0 %788
        %790 = vmax.xlane.f32.xlu0 %v339
        %v791 = vpop.xlane.xlu0 %790
        %792 = vmax.xlane.f32.xlu0 %v340
        %v793 = vpop.xlane.xlu0 %792
        %794 = vmax.xlane.f32.xlu0 %v341
        %v795 = vpop.xlane.xlu0 %794
        %796 = vmax.xlane.f32.xlu0 %v342
        %v797 = vpop.xlane.xlu0 %796
        %798 = vmax.xlane.f32.xlu0 %v343
        %v799 = vpop.xlane.xlu0 %798
        %800 = vmax.xlane.f32.xlu0 %v344
        %v801 = vpop.xlane.xlu0 %800
        %802 = vmax.xlane.f32.xlu0 %v345
        %v803 = vpop.xlane.xlu0 %802
        %804 = vmax.xlane.f32.xlu0 %v346
        %v805 = vpop.xlane.xlu0 %804
        %806 = vmax.xlane.f32.xlu0 %v347
        %v807 = vpop.xlane.xlu0 %806
        %808 = vmax.xlane.f32.xlu0 %v348
        %v809 = vpop.xlane.xlu0 %808
        %810 = vmax.xlane.f32.xlu0 %v349
        %v811 = vpop.xlane.xlu0 %810
        %812 = vmax.xlane.f32.xlu0 %v350
        %v813 = vpop.xlane.xlu0 %812
        %814 = vmax.xlane.f32.xlu0 %v351
        %v815 = vpop.xlane.xlu0 %814
        %816 = vmax.xlane.f32.xlu0 %v352
        %v817 = vpop.xlane.xlu0 %816
        %818 = vmax.xlane.f32.xlu0 %v353
        %v819 = vpop.xlane.xlu0 %818
        %820 = vmax.xlane.f32.xlu0 %v354
        %v821 = vpop.xlane.xlu0 %820
        %822 = vmax.xlane.f32.xlu0 %v355
        %v823 = vpop.xlane.xlu0 %822
        %824 = vmax.xlane.f32.xlu0 %v356
        %v825 = vpop.xlane.xlu0 %824
        %826 = vmax.xlane.f32.xlu0 %v357
        %v827 = vpop.xlane.xlu0 %826
        %828 = vmax.xlane.f32.xlu0 %v358
        %v829 = vpop.xlane.xlu0 %828
        %830 = vmax.xlane.f32.xlu0 %v359
        %v831 = vpop.xlane.xlu0 %830
        %832 = vmax.xlane.f32.xlu0 %v360
        %v833 = vpop.xlane.xlu0 %832
        %834 = vmax.xlane.f32.xlu0 %v361
        %v835 = vpop.xlane.xlu0 %834
        %836 = vmax.xlane.f32.xlu0 %v362
        %v837 = vpop.xlane.xlu0 %836
        %838 = vmax.xlane.f32.xlu0 %v363
        %v839 = vpop.xlane.xlu0 %838
        %840 = vmax.xlane.f32.xlu0 %v364
        %v841 = vpop.xlane.xlu0 %840
        %842 = vmax.xlane.f32.xlu0 %v365
        %v843 = vpop.xlane.xlu0 %842
        %844 = vmax.xlane.f32.xlu0 %v366
        %v845 = vpop.xlane.xlu0 %844
        %846 = vmax.xlane.f32.xlu0 %v367
        %v847 = vpop.xlane.xlu0 %846
        %848 = vmax.xlane.f32.xlu0 %v368
        %v849 = vpop.xlane.xlu0 %848
        %v850 = vld [vmem:[%s1] sm:$0xff]
        %v851 = vld [vmem:[%s1 + $0x8] sm:$0xff]
        %v852 = vld [vmem:[%s1 + $0x10] sm:$0xff]
        %v853 = vld [vmem:[%s1 + $0x18] sm:$0xff]
        %v854 = vld [vmem:[%s1 + $0x20] sm:$0xff]
        %v855 = vld [vmem:[%s1 + $0x28] sm:$0xff]
        %v856 = vld [vmem:[%s2] sm:$0xff]
        %v857 = vld [vmem:[%s2 + $0x8] sm:$0xff]
        %v858 = vld [vmem:[%s2 + $0x10] sm:$0xff]
        %v859 = vld [vmem:[%s2 + $0x18] sm:$0xff]
        %v860 = vld [vmem:[%s2 + $0x20] sm:$0xff]
        %v861 = vld [vmem:[%s2 + $0x28] sm:$0xff]
        %v958 = vlaneseq
        %v959 = vand.u32 %v958, 127
        %v960 = vlaneseq
        %v961 = vshrl.u32 %v960, 7
        %v962 = vsub.s32 %v959, %v961
        %v963 = vrot.slane %v659, %v962
        %v964 = vadd.s32 %v959, 4294967288
        %v965 = vlaneseq
        %v966 = vshrl.u32 %v965, 7
        %v967 = vsub.s32 %v964, %v966
        %v968 = vrot.slane %v661, %v967
        %vm969 = vcmask 130112
        %v970 = vsel %vm969, %v968, %v963
        %v971 = vadd.s32 %v959, 4294967280
        %v972 = vlaneseq
        %v973 = vshrl.u32 %v972, 7
        %v974 = vsub.s32 %v971, %v973
        %v975 = vrot.slane %v663, %v974
        %vm976 = vcmask 195712
        %v977 = vsel %vm976, %v975, %v970
        %v978 = vadd.s32 %v959, 4294967272
        %v979 = vlaneseq
        %v980 = vshrl.u32 %v979, 7
        %v981 = vsub.s32 %v978, %v980
        %v982 = vrot.slane %v665, %v981
        %vm983 = vcmask 261312
        %v984 = vsel %vm983, %v982, %v977
        %v985 = vadd.s32 %v959, 4294967264
        %v986 = vlaneseq
        %v987 = vshrl.u32 %v986, 7
        %v988 = vsub.s32 %v985, %v987
        %v989 = vrot.slane %v667, %v988
        %vm990 = vcmask 326912
        %v991 = vsel %vm990, %v989, %v984
        %v992 = vadd.s32 %v959, 4294967256
        %v993 = vlaneseq
        %v994 = vshrl.u32 %v993, 7
        %v995 = vsub.s32 %v992, %v994
        %v996 = vrot.slane %v669, %v995
        %vm997 = vcmask 392512
        %v998 = vsel %vm997, %v996, %v991
        %v999 = vlaneseq
        %v1000 = vshrl.u32 %v999, 7
        %v1001 = vsub.s32 %v959, %v1000
        %v1002 = vrot.slane %v671, %v1001
        %v1003 = vlaneseq
        %v1004 = vshrl.u32 %v1003, 7
        %v1005 = vsub.s32 %v964, %v1004
        %v1006 = vrot.slane %v673, %v1005
        %v1007 = vsel %vm969, %v1006, %v1002
        %v1008 = vlaneseq
        %v1009 = vshrl.u32 %v1008, 7
        %v1010 = vsub.s32 %v971, %v1009
        %v1011 = vrot.slane %v675, %v1010
        %v1012 = vsel %vm976, %v1011, %v1007
        %v1013 = vlaneseq
        %v1014 = vshrl.u32 %v1013, 7
        %v1015 = vsub.s32 %v978, %v1014
        %v1016 = vrot.slane %v677, %v1015
        %v1017 = vsel %vm983, %v1016, %v1012
        %v1018 = vlaneseq
        %v1019 = vshrl.u32 %v1018, 7
        %v1020 = vsub.s32 %v985, %v1019
        %v1021 = vrot.slane %v679, %v1020
        %v1022 = vsel %vm990, %v1021, %v1017
        %v1023 = vlaneseq
        %v1024 = vshrl.u32 %v1023, 7
        %v1025 = vsub.s32 %v992, %v1024
        %v1026 = vrot.slane %v681, %v1025
        %v1027 = vsel %vm997, %v1026, %v1022
        %v1028 = vlaneseq
        %v1029 = vshrl.u32 %v1028, 7
        %v1030 = vsub.s32 %v959, %v1029
        %v1031 = vrot.slane %v683, %v1030
        %v1032 = vlaneseq
        %v1033 = vshrl.u32 %v1032, 7
        %v1034 = vsub.s32 %v964, %v1033
        %v1035 = vrot.slane %v685, %v1034
        %v1036 = vsel %vm969, %v1035, %v1031
        %v1037 = vlaneseq
        %v1038 = vshrl.u32 %v1037, 7
        %v1039 = vsub.s32 %v971, %v1038
        %v1040 = vrot.slane %v687, %v1039
        %v1041 = vsel %vm976, %v1040, %v1036
        %v1042 = vlaneseq
        %v1043 = vshrl.u32 %v1042, 7
        %v1044 = vsub.s32 %v978, %v1043
        %v1045 = vrot.slane %v689, %v1044
        %v1046 = vsel %vm983, %v1045, %v1041
        %v1047 = vlaneseq
        %v1048 = vshrl.u32 %v1047, 7
        %v1049 = vsub.s32 %v985, %v1048
        %v1050 = vrot.slane %v691, %v1049
        %v1051 = vsel %vm990, %v1050, %v1046
        %v1052 = vlaneseq
        %v1053 = vshrl.u32 %v1052, 7
        %v1054 = vsub.s32 %v992, %v1053
        %v1055 = vrot.slane %v693, %v1054
        %v1056 = vsel %vm997, %v1055, %v1051
        %v1057 = vlaneseq
        %v1058 = vshrl.u32 %v1057, 7
        %v1059 = vsub.s32 %v959, %v1058
        %v1060 = vrot.slane %v695, %v1059
        %v1061 = vlaneseq
        %v1062 = vshrl.u32 %v1061, 7
        %v1063 = vsub.s32 %v964, %v1062
        %v1064 = vrot.slane %v697, %v1063
        %v1065 = vsel %vm969, %v1064, %v1060
        %v1066 = vlaneseq
        %v1067 = vshrl.u32 %v1066, 7
        %v1068 = vsub.s32 %v971, %v1067
        %v1069 = vrot.slane %v699, %v1068
        %v1070 = vsel %vm976, %v1069, %v1065
        %v1071 = vlaneseq
        %v1072 = vshrl.u32 %v1071, 7
        %v1073 = vsub.s32 %v978, %v1072
        %v1074 = vrot.slane %v701, %v1073
        %v1075 = vsel %vm983, %v1074, %v1070
        %v1076 = vlaneseq
        %v1077 = vshrl.u32 %v1076, 7
        %v1078 = vsub.s32 %v985, %v1077
        %v1079 = vrot.slane %v703, %v1078
        %v1080 = vsel %vm990, %v1079, %v1075
        %v1081 = vlaneseq
        %v1082 = vshrl.u32 %v1081, 7
        %v1083 = vsub.s32 %v992, %v1082
        %v1084 = vrot.slane %v705, %v1083
        %v1085 = vsel %vm997, %v1084, %v1080
        %v1086 = vlaneseq
        %v1087 = vshrl.u32 %v1086, 7
        %v1088 = vsub.s32 %v959, %v1087
        %v1089 = vrot.slane %v707, %v1088
        %v1090 = vlaneseq
        %v1091 = vshrl.u32 %v1090, 7
        %v1092 = vsub.s32 %v964, %v1091
        %v1093 = vrot.slane %v709, %v1092
        %v1094 = vsel %vm969, %v1093, %v1089
        %v1095 = vlaneseq
        %v1096 = vshrl.u32 %v1095, 7
        %v1097 = vsub.s32 %v971, %v1096
        %v1098 = vrot.slane %v711, %v1097
        %v1099 = vsel %vm976, %v1098, %v1094
        %v1100 = vlaneseq
        %v1101 = vshrl.u32 %v1100, 7
        %v1102 = vsub.s32 %v978, %v1101
        %v1103 = vrot.slane %v713, %v1102
        %v1104 = vsel %vm983, %v1103, %v1099
        %v1105 = vlaneseq
        %v1106 = vshrl.u32 %v1105, 7
        %v1107 = vsub.s32 %v985, %v1106
        %v1108 = vrot.slane %v715, %v1107
        %v1109 = vsel %vm990, %v1108, %v1104
        %v1110 = vlaneseq
        %v1111 = vshrl.u32 %v1110, 7
        %v1112 = vsub.s32 %v992, %v1111
        %v1113 = vrot.slane %v717, %v1112
        %v1114 = vsel %vm997, %v1113, %v1109
        %v1115 = vlaneseq
        %v1116 = vshrl.u32 %v1115, 7
        %v1117 = vsub.s32 %v959, %v1116
        %v1118 = vrot.slane %v719, %v1117
        %v1119 = vlaneseq
        %v1120 = vshrl.u32 %v1119, 7
        %v1121 = vsub.s32 %v964, %v1120
        %v1122 = vrot.slane %v721, %v1121
        %v1123 = vsel %vm969, %v1122, %v1118
        %v1124 = vlaneseq
        %v1125 = vshrl.u32 %v1124, 7
        %v1126 = vsub.s32 %v971, %v1125
        %v1127 = vrot.slane %v723, %v1126
        %v1128 = vsel %vm976, %v1127, %v1123
        %v1129 = vlaneseq
        %v1130 = vshrl.u32 %v1129, 7
        %v1131 = vsub.s32 %v978, %v1130
        %v1132 = vrot.slane %v725, %v1131
        %v1133 = vsel %vm983, %v1132, %v1128
        %v1134 = vlaneseq
        %v1135 = vshrl.u32 %v1134, 7
        %v1136 = vsub.s32 %v985, %v1135
        %v1137 = vrot.slane %v727, %v1136
        %v1138 = vsel %vm990, %v1137, %v1133
        %v1139 = vlaneseq
        %v1140 = vshrl.u32 %v1139, 7
        %v1141 = vsub.s32 %v992, %v1140
        %v1142 = vrot.slane %v729, %v1141
        %v1143 = vsel %vm997, %v1142, %v1138
        %v1144 = vlaneseq
        %v1145 = vshrl.u32 %v1144, 7
        %v1146 = vsub.s32 %v959, %v1145
        %v1147 = vrot.slane %v731, %v1146
        %v1148 = vlaneseq
        %v1149 = vshrl.u32 %v1148, 7
        %v1150 = vsub.s32 %v964, %v1149
        %v1151 = vrot.slane %v733, %v1150
        %v1152 = vsel %vm969, %v1151, %v1147
        %v1153 = vlaneseq
        %v1154 = vshrl.u32 %v1153, 7
        %v1155 = vsub.s32 %v971, %v1154
        %v1156 = vrot.slane %v735, %v1155
        %v1157 = vsel %vm976, %v1156, %v1152
        %v1158 = vlaneseq
        %v1159 = vshrl.u32 %v1158, 7
        %v1160 = vsub.s32 %v978, %v1159
        %v1161 = vrot.slane %v737, %v1160
        %v1162 = vsel %vm983, %v1161, %v1157
        %v1163 = vlaneseq
        %v1164 = vshrl.u32 %v1163, 7
        %v1165 = vsub.s32 %v985, %v1164
        %v1166 = vrot.slane %v739, %v1165
        %v1167 = vsel %vm990, %v1166, %v1162
        %v1168 = vlaneseq
        %v1169 = vshrl.u32 %v1168, 7
        %v1170 = vsub.s32 %v992, %v1169
        %v1171 = vrot.slane %v741, %v1170
        %v1172 = vsel %vm997, %v1171, %v1167
        %v1173 = vlaneseq
        %v1174 = vshrl.u32 %v1173, 7
        %v1175 = vsub.s32 %v959, %v1174
        %v1176 = vrot.slane %v743, %v1175
        %v1177 = vlaneseq
        %v1178 = vshrl.u32 %v1177, 7
        %v1179 = vsub.s32 %v964, %v1178
        %v1180 = vrot.slane %v745, %v1179
        %v1181 = vsel %vm969, %v1180, %v1176
        %v1182 = vlaneseq
        %v1183 = vshrl.u32 %v1182, 7
        %v1184 = vsub.s32 %v971, %v1183
        %v1185 = vrot.slane %v747, %v1184
        %v1186 = vsel %vm976, %v1185, %v1181
        %v1187 = vlaneseq
        %v1188 = vshrl.u32 %v1187, 7
        %v1189 = vsub.s32 %v978, %v1188
        %v1190 = vrot.slane %v749, %v1189
        %v1191 = vsel %vm983, %v1190, %v1186
        %v1192 = vlaneseq
        %v1193 = vshrl.u32 %v1192, 7
        %v1194 = vsub.s32 %v985, %v1193
        %v1195 = vrot.slane %v751, %v1194
        %v1196 = vsel %vm990, %v1195, %v1191
        %v1197 = vlaneseq
        %v1198 = vshrl.u32 %v1197, 7
        %v1199 = vsub.s32 %v992, %v1198
        %v1200 = vrot.slane %v753, %v1199
        %v1201 = vsel %vm997, %v1200, %v1196
        %v1202 = vlaneseq
        %v1203 = vshrl.u32 %v1202, 7
        %v1204 = vsub.s32 %v959, %v1203
        %v1205 = vrot.slane %v755, %v1204
        %v1206 = vlaneseq
        %v1207 = vshrl.u32 %v1206, 7
        %v1208 = vsub.s32 %v964, %v1207
        %v1209 = vrot.slane %v757, %v1208
        %v1210 = vsel %vm969, %v1209, %v1205
        %v1211 = vlaneseq
        %v1212 = vshrl.u32 %v1211, 7
        %v1213 = vsub.s32 %v971, %v1212
        %v1214 = vrot.slane %v759, %v1213
        %v1215 = vsel %vm976, %v1214, %v1210
        %v1216 = vlaneseq
        %v1217 = vshrl.u32 %v1216, 7
        %v1218 = vsub.s32 %v978, %v1217
        %v1219 = vrot.slane %v761, %v1218
        %v1220 = vsel %vm983, %v1219, %v1215
        %v1221 = vlaneseq
        %v1222 = vshrl.u32 %v1221, 7
        %v1223 = vsub.s32 %v985, %v1222
        %v1224 = vrot.slane %v763, %v1223
        %v1225 = vsel %vm990, %v1224, %v1220
        %v1226 = vlaneseq
        %v1227 = vshrl.u32 %v1226, 7
        %v1228 = vsub.s32 %v992, %v1227
        %v1229 = vrot.slane %v765, %v1228
        %v1230 = vsel %vm997, %v1229, %v1225
        %v1231 = vlaneseq
        %v1232 = vshrl.u32 %v1231, 7
        %v1233 = vsub.s32 %v959, %v1232
        %v1234 = vrot.slane %v767, %v1233
        %v1235 = vlaneseq
        %v1236 = vshrl.u32 %v1235, 7
        %v1237 = vsub.s32 %v964, %v1236
        %v1238 = vrot.slane %v769, %v1237
        %v1239 = vsel %vm969, %v1238, %v1234
        %v1240 = vlaneseq
        %v1241 = vshrl.u32 %v1240, 7
        %v1242 = vsub.s32 %v971, %v1241
        %v1243 = vrot.slane %v771, %v1242
        %v1244 = vsel %vm976, %v1243, %v1239
        %v1245 = vlaneseq
        %v1246 = vshrl.u32 %v1245, 7
        %v1247 = vsub.s32 %v978, %v1246
        %v1248 = vrot.slane %v773, %v1247
        %v1249 = vsel %vm983, %v1248, %v1244
        %v1250 = vlaneseq
        %v1251 = vshrl.u32 %v1250, 7
        %v1252 = vsub.s32 %v985, %v1251
        %v1253 = vrot.slane %v775, %v1252
        %v1254 = vsel %vm990, %v1253, %v1249
        %v1255 = vlaneseq
        %v1256 = vshrl.u32 %v1255, 7
        %v1257 = vsub.s32 %v992, %v1256
        %v1258 = vrot.slane %v777, %v1257
        %v1259 = vsel %vm997, %v1258, %v1254
        %v1260 = vlaneseq
        %v1261 = vshrl.u32 %v1260, 7
        %v1262 = vsub.s32 %v959, %v1261
        %v1263 = vrot.slane %v779, %v1262
        %v1264 = vlaneseq
        %v1265 = vshrl.u32 %v1264, 7
        %v1266 = vsub.s32 %v964, %v1265
        %v1267 = vrot.slane %v781, %v1266
        %v1268 = vsel %vm969, %v1267, %v1263
        %v1269 = vlaneseq
        %v1270 = vshrl.u32 %v1269, 7
        %v1271 = vsub.s32 %v971, %v1270
        %v1272 = vrot.slane %v783, %v1271
        %v1273 = vsel %vm976, %v1272, %v1268
        %v1274 = vlaneseq
        %v1275 = vshrl.u32 %v1274, 7
        %v1276 = vsub.s32 %v978, %v1275
        %v1277 = vrot.slane %v785, %v1276
        %v1278 = vsel %vm983, %v1277, %v1273
        %v1279 = vlaneseq
        %v1280 = vshrl.u32 %v1279, 7
        %v1281 = vsub.s32 %v985, %v1280
        %v1282 = vrot.slane %v787, %v1281
        %v1283 = vsel %vm990, %v1282, %v1278
        %v1284 = vlaneseq
        %v1285 = vshrl.u32 %v1284, 7
        %v1286 = vsub.s32 %v992, %v1285
        %v1287 = vrot.slane %v789, %v1286
        %v1288 = vsel %vm997, %v1287, %v1283
        %v1289 = vlaneseq
        %v1290 = vshrl.u32 %v1289, 7
        %v1291 = vsub.s32 %v959, %v1290
        %v1292 = vrot.slane %v791, %v1291
        %v1293 = vlaneseq
        %v1294 = vshrl.u32 %v1293, 7
        %v1295 = vsub.s32 %v964, %v1294
        %v1296 = vrot.slane %v793, %v1295
        %v1297 = vsel %vm969, %v1296, %v1292
        %v1298 = vlaneseq
        %v1299 = vshrl.u32 %v1298, 7
        %v1300 = vsub.s32 %v971, %v1299
        %v1301 = vrot.slane %v795, %v1300
        %v1302 = vsel %vm976, %v1301, %v1297
        %v1303 = vlaneseq
        %v1304 = vshrl.u32 %v1303, 7
        %v1305 = vsub.s32 %v978, %v1304
        %v1306 = vrot.slane %v797, %v1305
        %v1307 = vsel %vm983, %v1306, %v1302
        %v1308 = vlaneseq
        %v1309 = vshrl.u32 %v1308, 7
        %v1310 = vsub.s32 %v985, %v1309
        %v1311 = vrot.slane %v799, %v1310
        %v1312 = vsel %vm990, %v1311, %v1307
        %v1313 = vlaneseq
        %v1314 = vshrl.u32 %v1313, 7
        %v1315 = vsub.s32 %v992, %v1314
        %v1316 = vrot.slane %v801, %v1315
        %v1317 = vsel %vm997, %v1316, %v1312
        %v1318 = vlaneseq
        %v1319 = vshrl.u32 %v1318, 7
        %v1320 = vsub.s32 %v959, %v1319
        %v1321 = vrot.slane %v803, %v1320
        %v1322 = vlaneseq
        %v1323 = vshrl.u32 %v1322, 7
        %v1324 = vsub.s32 %v964, %v1323
        %v1325 = vrot.slane %v805, %v1324
        %v1326 = vsel %vm969, %v1325, %v1321
        %v1327 = vlaneseq
        %v1328 = vshrl.u32 %v1327, 7
        %v1329 = vsub.s32 %v971, %v1328
        %v1330 = vrot.slane %v807, %v1329
        %v1331 = vsel %vm976, %v1330, %v1326
        %v1332 = vlaneseq
        %v1333 = vshrl.u32 %v1332, 7
        %v1334 = vsub.s32 %v978, %v1333
        %v1335 = vrot.slane %v809, %v1334
        %v1336 = vsel %vm983, %v1335, %v1331
        %v1337 = vlaneseq
        %v1338 = vshrl.u32 %v1337, 7
        %v1339 = vsub.s32 %v985, %v1338
        %v1340 = vrot.slane %v811, %v1339
        %v1341 = vsel %vm990, %v1340, %v1336
        %v1342 = vlaneseq
        %v1343 = vshrl.u32 %v1342, 7
        %v1344 = vsub.s32 %v992, %v1343
        %v1345 = vrot.slane %v813, %v1344
        %v1346 = vsel %vm997, %v1345, %v1341
        %v1347 = vlaneseq
        %v1348 = vshrl.u32 %v1347, 7
        %v1349 = vsub.s32 %v959, %v1348
        %v1350 = vrot.slane %v815, %v1349
        %v1351 = vlaneseq
        %v1352 = vshrl.u32 %v1351, 7
        %v1353 = vsub.s32 %v964, %v1352
        %v1354 = vrot.slane %v817, %v1353
        %v1355 = vsel %vm969, %v1354, %v1350
        %v1356 = vlaneseq
        %v1357 = vshrl.u32 %v1356, 7
        %v1358 = vsub.s32 %v971, %v1357
        %v1359 = vrot.slane %v819, %v1358
        %v1360 = vsel %vm976, %v1359, %v1355
        %v1361 = vlaneseq
        %v1362 = vshrl.u32 %v1361, 7
        %v1363 = vsub.s32 %v978, %v1362
        %v1364 = vrot.slane %v821, %v1363
        %v1365 = vsel %vm983, %v1364, %v1360
        %v1366 = vlaneseq
        %v1367 = vshrl.u32 %v1366, 7
        %v1368 = vsub.s32 %v985, %v1367
        %v1369 = vrot.slane %v823, %v1368
        %v1370 = vsel %vm990, %v1369, %v1365
        %v1371 = vlaneseq
        %v1372 = vshrl.u32 %v1371, 7
        %v1373 = vsub.s32 %v992, %v1372
        %v1374 = vrot.slane %v825, %v1373
        %v1375 = vsel %vm997, %v1374, %v1370
        %v1376 = vlaneseq
        %v1377 = vshrl.u32 %v1376, 7
        %v1378 = vsub.s32 %v959, %v1377
        %v1379 = vrot.slane %v827, %v1378
        %v1380 = vlaneseq
        %v1381 = vshrl.u32 %v1380, 7
        %v1382 = vsub.s32 %v964, %v1381
        %v1383 = vrot.slane %v829, %v1382
        %v1384 = vsel %vm969, %v1383, %v1379
        %v1385 = vlaneseq
        %v1386 = vshrl.u32 %v1385, 7
        %v1387 = vsub.s32 %v971, %v1386
        %v1388 = vrot.slane %v831, %v1387
        %v1389 = vsel %vm976, %v1388, %v1384
        %v1390 = vlaneseq
        %v1391 = vshrl.u32 %v1390, 7
        %v1392 = vsub.s32 %v978, %v1391
        %v1393 = vrot.slane %v833, %v1392
        %v1394 = vsel %vm983, %v1393, %v1389
        %v1395 = vlaneseq
        %v1396 = vshrl.u32 %v1395, 7
        %v1397 = vsub.s32 %v985, %v1396
        %v1398 = vrot.slane %v835, %v1397
        %v1399 = vsel %vm990, %v1398, %v1394
        %v1400 = vlaneseq
        %v1401 = vshrl.u32 %v1400, 7
        %v1402 = vsub.s32 %v992, %v1401
        %v1403 = vrot.slane %v837, %v1402
        %v1404 = vsel %vm997, %v1403, %v1399
        %v1405 = vlaneseq
        %v1406 = vshrl.u32 %v1405, 7
        %v1407 = vsub.s32 %v959, %v1406
        %v1408 = vrot.slane %v839, %v1407
        %v1409 = vlaneseq
        %v1410 = vshrl.u32 %v1409, 7
        %v1411 = vsub.s32 %v964, %v1410
        %v1412 = vrot.slane %v841, %v1411
        %v1413 = vsel %vm969, %v1412, %v1408
        %v1414 = vlaneseq
        %v1415 = vshrl.u32 %v1414, 7
        %v1416 = vsub.s32 %v971, %v1415
        %v1417 = vrot.slane %v843, %v1416
        %v1418 = vsel %vm976, %v1417, %v1413
        %v1419 = vlaneseq
        %v1420 = vshrl.u32 %v1419, 7
        %v1421 = vsub.s32 %v978, %v1420
        %v1422 = vrot.slane %v845, %v1421
        %v1423 = vsel %vm983, %v1422, %v1418
        %v1424 = vlaneseq
        %v1425 = vshrl.u32 %v1424, 7
        %v1426 = vsub.s32 %v985, %v1425
        %v1427 = vrot.slane %v847, %v1426
        %v1428 = vsel %vm990, %v1427, %v1423
        %v1429 = vlaneseq
        %v1430 = vshrl.u32 %v1429, 7
        %v1431 = vsub.s32 %v992, %v1430
        %v1432 = vrot.slane %v849, %v1431
        %v1433 = vsel %vm997, %v1432, %v1428
        %vm1434 = vcmask 1041409
        %v1435 = vsel %vm1434, %v1027, %v998
        %vm1436 = vcmask 1042434
        %v1437 = vsel %vm1436, %v1056, %v1435
        %vm1438 = vcmask 1043459
        %v1439 = vsel %vm1438, %v1085, %v1437
        %vm1440 = vcmask 1044484
        %v1441 = vsel %vm1440, %v1114, %v1439
        %vm1442 = vcmask 1045509
        %v1443 = vsel %vm1442, %v1143, %v1441
        %vm1444 = vcmask 1046534
        %v1445 = vsel %vm1444, %v1172, %v1443
        %vm1446 = vcmask 1047559
        %v1447 = vsel %vm1446, %v1201, %v1445
        %v1448 = vsel %vm1434, %v1259, %v1230
        %v1449 = vsel %vm1436, %v1288, %v1448
        %v1450 = vsel %vm1438, %v1317, %v1449
        %v1451 = vsel %vm1440, %v1346, %v1450
        %v1452 = vsel %vm1442, %v1375, %v1451
        %v1453 = vsel %vm1444, %v1404, %v1452
        %v1454 = vsel %vm1446, %v1433, %v1453
        %vm1455 = vcmask 392192
        %v1456 = vsel %vm1455, %v1447, 0
        %v1458 = vsel %vm1455, %v1454, 0
        %1460 = vmatprep.subr.mxu0 0.0
        %1461 = vmatpush1.msra.mxu0 %v856
        %1462 = vmatprep.subr.mxu0 0.0
        %1463 = vmatpush1.msra.mxu0 %v857
        %1464 = vmatprep.subr.mxu0 0.0
        %1465 = vmatpush1.msra.mxu0 %v858
        %1466 = vmatprep.subr.mxu0 0.0
        %1467 = vmatpush1.msra.mxu0 %v859
        %1468 = vmatprep.subr.mxu0 0.0
        %1469 = vmatpush1.msra.mxu0 %v860
        %1470 = vmatprep.subr.mxu0 0.0
        %1471 = vmatpush1.msra.mxu0 %v861
        %1472 = vmatprep.subr.mxu0 0.0
        %1473 = vmatpush1.msra.mxu0 0.0
        %1474 = vmatprep.subr.mxu0 0.0
        %1475 = vmatpush1.msra.mxu0 0.0
        %1476 = vmatprep.subr.mxu0 0.0
        %1477 = vmatpush1.msra.mxu0 0.0
        %1478 = vmatprep.subr.mxu0 0.0
        %1479 = vmatpush1.msra.mxu0 0.0
        %1480 = vmatprep.subr.mxu0 0.0
        %1481 = vmatpush1.msra.mxu0 0.0
        %1482 = vmatprep.subr.mxu0 0.0
        %1483 = vmatpush1.msra.mxu0 0.0
        %1484 = vmatprep.subr.mxu0 0.0
        %1485 = vmatpush1.msra.mxu0 0.0
        %1486 = vmatprep.subr.mxu0 0.0
        %1487 = vmatpush1.msra.mxu0 0.0
        %1488 = vmatprep.subr.mxu0 0.0
        %1489 = vmatpush1.msra.mxu0 0.0
        %1490 = vmatprep.subr.mxu0 0.0
        %1491 = vmatpush1.msra.mxu0 0.0
        %1492 = vmatprep.subr.mxu0 0.0
        %1493 = vmatpush1.msra.mxu0 0.0
        %1494 = vmatprep.subr.mxu0 0.0
        %1495 = vmatpush1.msra.mxu0 0.0
        %1496 = vmatprep.subr.mxu0 0.0
        %1497 = vmatpush1.msra.mxu0 0.0
        %1498 = vmatprep.subr.mxu0 0.0
        %1499 = vmatpush1.msra.mxu0 0.0
        %1500 = vmatprep.subr.mxu0 0.0
        %1501 = vmatpush1.msra.mxu0 0.0
        %1502 = vmatprep.subr.mxu0 0.0
        %1503 = vmatpush1.msra.mxu0 0.0
        %1504 = vmatprep.subr.mxu0 0.0
        %1505 = vmatpush1.msra.mxu0 0.0
        %1506 = vmatprep.subr.mxu0 0.0
        %1507 = vmatpush1.msra.mxu0 0.0
        %1508 = vmatprep.subr.mxu0 0.0
        %1509 = vmatpush1.msra.mxu0 0.0
        %1510 = vmatprep.subr.mxu0 0.0
        %1511 = vmatpush1.msra.mxu0 0.0
        %1512 = vmatprep.subr.mxu0 0.0
        %1513 = vmatpush1.msra.mxu0 0.0
        %1514 = vmatprep.subr.mxu0 0.0
        %1515 = vmatpush1.msra.mxu0 0.0
        %1516 = vmatprep.subr.mxu0 0.0
        %1517 = vmatpush1.msra.mxu0 0.0
        %1518 = vmatprep.subr.mxu0 0.0
        %1519 = vmatpush1.msra.mxu0 0.0
        %1520 = vmatprep.subr.mxu0 0.0
        %1521 = vmatpush1.msra.mxu0 0.0
        %1522 = vmatprep.subr.mxu0 0.0
        %1523 = vmatpush1.msra.mxu0 0.0
        %1524 = vmatprep.mubr.f32.mxu0 0.0
        %1525 = vmatmul.mubr.f32.gmra.mrb[0].mxu0 %v1456
        %v1526 = vpop.f32.mrb[0].mxu0
        %v1527 = vadd.f32 0.0, %v1526
        %v1528 = vpop.f32.mrb[0].mxu0
        %1529 = vmatprep.mubr.f32.mxu0 0.0
        %1530 = vmatmul.mubr.f32.gmra.mrb[0].mxu0 %v1458
        %v1531 = vpop.f32.mrb[0].mxu0
        %v1532 = vadd.f32 0.0, %v1531
        %v1533 = vpop.f32.mrb[0].mxu0
        %1534 = vdwg.mxu0
        %v1631 = vlaneseq
        %v1632 = vshrl.u32 %v1631, 7
        %v1633 = vsub.s32 %v959, %v1632
        %v1634 = vrot.slane %v562, %v1633
        %v1635 = vlaneseq
        %v1636 = vshrl.u32 %v1635, 7
        %v1637 = vsub.s32 %v964, %v1636
        %v1638 = vrot.slane %v563, %v1637
        %v1639 = vsel %vm969, %v1638, %v1634
        %v1640 = vlaneseq
        %v1641 = vshrl.u32 %v1640, 7
        %v1642 = vsub.s32 %v971, %v1641
        %v1643 = vrot.slane %v564, %v1642
        %v1644 = vsel %vm976, %v1643, %v1639
        %v1645 = vlaneseq
        %v1646 = vshrl.u32 %v1645, 7
        %v1647 = vsub.s32 %v978, %v1646
        %v1648 = vrot.slane %v565, %v1647
        %v1649 = vsel %vm983, %v1648, %v1644
        %v1650 = vlaneseq
        %v1651 = vshrl.u32 %v1650, 7
        %v1652 = vsub.s32 %v985, %v1651
        %v1653 = vrot.slane %v566, %v1652
        %v1654 = vsel %vm990, %v1653, %v1649
        %v1655 = vlaneseq
        %v1656 = vshrl.u32 %v1655, 7
        %v1657 = vsub.s32 %v992, %v1656
        %v1658 = vrot.slane %v567, %v1657
        %v1659 = vsel %vm997, %v1658, %v1654
        %v1660 = vlaneseq
        %v1661 = vshrl.u32 %v1660, 7
        %v1662 = vsub.s32 %v959, %v1661
        %v1663 = vrot.slane %v568, %v1662
        %v1664 = vlaneseq
        %v1665 = vshrl.u32 %v1664, 7
        %v1666 = vsub.s32 %v964, %v1665
        %v1667 = vrot.slane %v569, %v1666
        %v1668 = vsel %vm969, %v1667, %v1663
        %v1669 = vlaneseq
        %v1670 = vshrl.u32 %v1669, 7
        %v1671 = vsub.s32 %v971, %v1670
        %v1672 = vrot.slane %v570, %v1671
        %v1673 = vsel %vm976, %v1672, %v1668
        %v1674 = vlaneseq
        %v1675 = vshrl.u32 %v1674, 7
        %v1676 = vsub.s32 %v978, %v1675
        %v1677 = vrot.slane %v571, %v1676
        %v1678 = vsel %vm983, %v1677, %v1673
        %v1679 = vlaneseq
        %v1680 = vshrl.u32 %v1679, 7
        %v1681 = vsub.s32 %v985, %v1680
        %v1682 = vrot.slane %v572, %v1681
        %v1683 = vsel %vm990, %v1682, %v1678
        %v1684 = vlaneseq
        %v1685 = vshrl.u32 %v1684, 7
        %v1686 = vsub.s32 %v992, %v1685
        %v1687 = vrot.slane %v573, %v1686
        %v1688 = vsel %vm997, %v1687, %v1683
        %v1689 = vlaneseq
        %v1690 = vshrl.u32 %v1689, 7
        %v1691 = vsub.s32 %v959, %v1690
        %v1692 = vrot.slane %v574, %v1691
        %v1693 = vlaneseq
        %v1694 = vshrl.u32 %v1693, 7
        %v1695 = vsub.s32 %v964, %v1694
        %v1696 = vrot.slane %v575, %v1695
        %v1697 = vsel %vm969, %v1696, %v1692
        %v1698 = vlaneseq
        %v1699 = vshrl.u32 %v1698, 7
        %v1700 = vsub.s32 %v971, %v1699
        %v1701 = vrot.slane %v576, %v1700
        %v1702 = vsel %vm976, %v1701, %v1697
        %v1703 = vlaneseq
        %v1704 = vshrl.u32 %v1703, 7
        %v1705 = vsub.s32 %v978, %v1704
        %v1706 = vrot.slane %v577, %v1705
        %v1707 = vsel %vm983, %v1706, %v1702
        %v1708 = vlaneseq
        %v1709 = vshrl.u32 %v1708, 7
        %v1710 = vsub.s32 %v985, %v1709
        %v1711 = vrot.slane %v578, %v1710
        %v1712 = vsel %vm990, %v1711, %v1707
        %v1713 = vlaneseq
        %v1714 = vshrl.u32 %v1713, 7
        %v1715 = vsub.s32 %v992, %v1714
        %v1716 = vrot.slane %v579, %v1715
        %v1717 = vsel %vm997, %v1716, %v1712
        %v1718 = vlaneseq
        %v1719 = vshrl.u32 %v1718, 7
        %v1720 = vsub.s32 %v959, %v1719
        %v1721 = vrot.slane %v580, %v1720
        %v1722 = vlaneseq
        %v1723 = vshrl.u32 %v1722, 7
        %v1724 = vsub.s32 %v964, %v1723
        %v1725 = vrot.slane %v581, %v1724
        %v1726 = vsel %vm969, %v1725, %v1721
        %v1727 = vlaneseq
        %v1728 = vshrl.u32 %v1727, 7
        %v1729 = vsub.s32 %v971, %v1728
        %v1730 = vrot.slane %v582, %v1729
        %v1731 = vsel %vm976, %v1730, %v1726
        %v1732 = vlaneseq
        %v1733 = vshrl.u32 %v1732, 7
        %v1734 = vsub.s32 %v978, %v1733
        %v1735 = vrot.slane %v583, %v1734
        %v1736 = vsel %vm983, %v1735, %v1731
        %v1737 = vlaneseq
        %v1738 = vshrl.u32 %v1737, 7
        %v1739 = vsub.s32 %v985, %v1738
        %v1740 = vrot.slane %v584, %v1739
        %v1741 = vsel %vm990, %v1740, %v1736
        %v1742 = vlaneseq
        %v1743 = vshrl.u32 %v1742, 7
        %v1744 = vsub.s32 %v992, %v1743
        %v1745 = vrot.slane %v585, %v1744
        %v1746 = vsel %vm997, %v1745, %v1741
        %v1747 = vlaneseq
        %v1748 = vshrl.u32 %v1747, 7
        %v1749 = vsub.s32 %v959, %v1748
        %v1750 = vrot.slane %v586, %v1749
        %v1751 = vlaneseq
        %v1752 = vshrl.u32 %v1751, 7
        %v1753 = vsub.s32 %v964, %v1752
        %v1754 = vrot.slane %v587, %v1753
        %v1755 = vsel %vm969, %v1754, %v1750
        %v1756 = vlaneseq
        %v1757 = vshrl.u32 %v1756, 7
        %v1758 = vsub.s32 %v971, %v1757
        %v1759 = vrot.slane %v588, %v1758
        %v1760 = vsel %vm976, %v1759, %v1755
        %v1761 = vlaneseq
        %v1762 = vshrl.u32 %v1761, 7
        %v1763 = vsub.s32 %v978, %v1762
        %v1764 = vrot.slane %v589, %v1763
        %v1765 = vsel %vm983, %v1764, %v1760
        %v1766 = vlaneseq
        %v1767 = vshrl.u32 %v1766, 7
        %v1768 = vsub.s32 %v985, %v1767
        %v1769 = vrot.slane %v590, %v1768
        %v1770 = vsel %vm990, %v1769, %v1765
        %v1771 = vlaneseq
        %v1772 = vshrl.u32 %v1771, 7
        %v1773 = vsub.s32 %v992, %v1772
        %v1774 = vrot.slane %v591, %v1773
        %v1775 = vsel %vm997, %v1774, %v1770
        %v1776 = vlaneseq
        %v1777 = vshrl.u32 %v1776, 7
        %v1778 = vsub.s32 %v959, %v1777
        %v1779 = vrot.slane %v592, %v1778
        %v1780 = vlaneseq
        %v1781 = vshrl.u32 %v1780, 7
        %v1782 = vsub.s32 %v964, %v1781
        %v1783 = vrot.slane %v593, %v1782
        %v1784 = vsel %vm969, %v1783, %v1779
        %v1785 = vlaneseq
        %v1786 = vshrl.u32 %v1785, 7
        %v1787 = vsub.s32 %v971, %v1786
        %v1788 = vrot.slane %v594, %v1787
        %v1789 = vsel %vm976, %v1788, %v1784
        %v1790 = vlaneseq
        %v1791 = vshrl.u32 %v1790, 7
        %v1792 = vsub.s32 %v978, %v1791
        %v1793 = vrot.slane %v595, %v1792
        %v1794 = vsel %vm983, %v1793, %v1789
        %v1795 = vlaneseq
        %v1796 = vshrl.u32 %v1795, 7
        %v1797 = vsub.s32 %v985, %v1796
        %v1798 = vrot.slane %v596, %v1797
        %v1799 = vsel %vm990, %v1798, %v1794
        %v1800 = vlaneseq
        %v1801 = vshrl.u32 %v1800, 7
        %v1802 = vsub.s32 %v992, %v1801
        %v1803 = vrot.slane %v597, %v1802
        %v1804 = vsel %vm997, %v1803, %v1799
        %v1805 = vlaneseq
        %v1806 = vshrl.u32 %v1805, 7
        %v1807 = vsub.s32 %v959, %v1806
        %v1808 = vrot.slane %v598, %v1807
        %v1809 = vlaneseq
        %v1810 = vshrl.u32 %v1809, 7
        %v1811 = vsub.s32 %v964, %v1810
        %v1812 = vrot.slane %v599, %v1811
        %v1813 = vsel %vm969, %v1812, %v1808
        %v1814 = vlaneseq
        %v1815 = vshrl.u32 %v1814, 7
        %v1816 = vsub.s32 %v971, %v1815
        %v1817 = vrot.slane %v600, %v1816
        %v1818 = vsel %vm976, %v1817, %v1813
        %v1819 = vlaneseq
        %v1820 = vshrl.u32 %v1819, 7
        %v1821 = vsub.s32 %v978, %v1820
        %v1822 = vrot.slane %v601, %v1821
        %v1823 = vsel %vm983, %v1822, %v1818
        %v1824 = vlaneseq
        %v1825 = vshrl.u32 %v1824, 7
        %v1826 = vsub.s32 %v985, %v1825
        %v1827 = vrot.slane %v602, %v1826
        %v1828 = vsel %vm990, %v1827, %v1823
        %v1829 = vlaneseq
        %v1830 = vshrl.u32 %v1829, 7
        %v1831 = vsub.s32 %v992, %v1830
        %v1832 = vrot.slane %v603, %v1831
        %v1833 = vsel %vm997, %v1832, %v1828
        %v1834 = vlaneseq
        %v1835 = vshrl.u32 %v1834, 7
        %v1836 = vsub.s32 %v959, %v1835
        %v1837 = vrot.slane %v604, %v1836
        %v1838 = vlaneseq
        %v1839 = vshrl.u32 %v1838, 7
        %v1840 = vsub.s32 %v964, %v1839
        %v1841 = vrot.slane %v605, %v1840
        %v1842 = vsel %vm969, %v1841, %v1837
        %v1843 = vlaneseq
        %v1844 = vshrl.u32 %v1843, 7
        %v1845 = vsub.s32 %v971, %v1844
        %v1846 = vrot.slane %v606, %v1845
        %v1847 = vsel %vm976, %v1846, %v1842
        %v1848 = vlaneseq
        %v1849 = vshrl.u32 %v1848, 7
        %v1850 = vsub.s32 %v978, %v1849
        %v1851 = vrot.slane %v607, %v1850
        %v1852 = vsel %vm983, %v1851, %v1847
        %v1853 = vlaneseq
        %v1854 = vshrl.u32 %v1853, 7
        %v1855 = vsub.s32 %v985, %v1854
        %v1856 = vrot.slane %v608, %v1855
        %v1857 = vsel %vm990, %v1856, %v1852
        %v1858 = vlaneseq
        %v1859 = vshrl.u32 %v1858, 7
        %v1860 = vsub.s32 %v992, %v1859
        %v1861 = vrot.slane %v609, %v1860
        %v1862 = vsel %vm997, %v1861, %v1857
        %v1863 = vlaneseq
        %v1864 = vshrl.u32 %v1863, 7
        %v1865 = vsub.s32 %v959, %v1864
        %v1866 = vrot.slane %v610, %v1865
        %v1867 = vlaneseq
        %v1868 = vshrl.u32 %v1867, 7
        %v1869 = vsub.s32 %v964, %v1868
        %v1870 = vrot.slane %v611, %v1869
        %v1871 = vsel %vm969, %v1870, %v1866
        %v1872 = vlaneseq
        %v1873 = vshrl.u32 %v1872, 7
        %v1874 = vsub.s32 %v971, %v1873
        %v1875 = vrot.slane %v612, %v1874
        %v1876 = vsel %vm976, %v1875, %v1871
        %v1877 = vlaneseq
        %v1878 = vshrl.u32 %v1877, 7
        %v1879 = vsub.s32 %v978, %v1878
        %v1880 = vrot.slane %v613, %v1879
        %v1881 = vsel %vm983, %v1880, %v1876
        %v1882 = vlaneseq
        %v1883 = vshrl.u32 %v1882, 7
        %v1884 = vsub.s32 %v985, %v1883
        %v1885 = vrot.slane %v614, %v1884
        %v1886 = vsel %vm990, %v1885, %v1881
        %v1887 = vlaneseq
        %v1888 = vshrl.u32 %v1887, 7
        %v1889 = vsub.s32 %v992, %v1888
        %v1890 = vrot.slane %v615, %v1889
        %v1891 = vsel %vm997, %v1890, %v1886
        %v1892 = vlaneseq
        %v1893 = vshrl.u32 %v1892, 7
        %v1894 = vsub.s32 %v959, %v1893
        %v1895 = vrot.slane %v616, %v1894
        %v1896 = vlaneseq
        %v1897 = vshrl.u32 %v1896, 7
        %v1898 = vsub.s32 %v964, %v1897
        %v1899 = vrot.slane %v617, %v1898
        %v1900 = vsel %vm969, %v1899, %v1895
        %v1901 = vlaneseq
        %v1902 = vshrl.u32 %v1901, 7
        %v1903 = vsub.s32 %v971, %v1902
        %v1904 = vrot.slane %v618, %v1903
        %v1905 = vsel %vm976, %v1904, %v1900
        %v1906 = vlaneseq
        %v1907 = vshrl.u32 %v1906, 7
        %v1908 = vsub.s32 %v978, %v1907
        %v1909 = vrot.slane %v619, %v1908
        %v1910 = vsel %vm983, %v1909, %v1905
        %v1911 = vlaneseq
        %v1912 = vshrl.u32 %v1911, 7
        %v1913 = vsub.s32 %v985, %v1912
        %v1914 = vrot.slane %v620, %v1913
        %v1915 = vsel %vm990, %v1914, %v1910
        %v1916 = vlaneseq
        %v1917 = vshrl.u32 %v1916, 7
        %v1918 = vsub.s32 %v992, %v1917
        %v1919 = vrot.slane %v621, %v1918
        %v1920 = vsel %vm997, %v1919, %v1915
        %v1921 = vlaneseq
        %v1922 = vshrl.u32 %v1921, 7
        %v1923 = vsub.s32 %v959, %v1922
        %v1924 = vrot.slane %v622, %v1923
        %v1925 = vlaneseq
        %v1926 = vshrl.u32 %v1925, 7
        %v1927 = vsub.s32 %v964, %v1926
        %v1928 = vrot.slane %v623, %v1927
        %v1929 = vsel %vm969, %v1928, %v1924
        %v1930 = vlaneseq
        %v1931 = vshrl.u32 %v1930, 7
        %v1932 = vsub.s32 %v971, %v1931
        %v1933 = vrot.slane %v624, %v1932
        %v1934 = vsel %vm976, %v1933, %v1929
        %v1935 = vlaneseq
        %v1936 = vshrl.u32 %v1935, 7
        %v1937 = vsub.s32 %v978, %v1936
        %v1938 = vrot.slane %v625, %v1937
        %v1939 = vsel %vm983, %v1938, %v1934
        %v1940 = vlaneseq
        %v1941 = vshrl.u32 %v1940, 7
        %v1942 = vsub.s32 %v985, %v1941
        %v1943 = vrot.slane %v626, %v1942
        %v1944 = vsel %vm990, %v1943, %v1939
        %v1945 = vlaneseq
        %v1946 = vshrl.u32 %v1945, 7
        %v1947 = vsub.s32 %v992, %v1946
        %v1948 = vrot.slane %v627, %v1947
        %v1949 = vsel %vm997, %v1948, %v1944
        %v1950 = vlaneseq
        %v1951 = vshrl.u32 %v1950, 7
        %v1952 = vsub.s32 %v959, %v1951
        %v1953 = vrot.slane %v628, %v1952
        %v1954 = vlaneseq
        %v1955 = vshrl.u32 %v1954, 7
        %v1956 = vsub.s32 %v964, %v1955
        %v1957 = vrot.slane %v629, %v1956
        %v1958 = vsel %vm969, %v1957, %v1953
        %v1959 = vlaneseq
        %v1960 = vshrl.u32 %v1959, 7
        %v1961 = vsub.s32 %v971, %v1960
        %v1962 = vrot.slane %v630, %v1961
        %v1963 = vsel %vm976, %v1962, %v1958
        %v1964 = vlaneseq
        %v1965 = vshrl.u32 %v1964, 7
        %v1966 = vsub.s32 %v978, %v1965
        %v1967 = vrot.slane %v631, %v1966
        %v1968 = vsel %vm983, %v1967, %v1963
        %v1969 = vlaneseq
        %v1970 = vshrl.u32 %v1969, 7
        %v1971 = vsub.s32 %v985, %v1970
        %v1972 = vrot.slane %v632, %v1971
        %v1973 = vsel %vm990, %v1972, %v1968
        %v1974 = vlaneseq
        %v1975 = vshrl.u32 %v1974, 7
        %v1976 = vsub.s32 %v992, %v1975
        %v1977 = vrot.slane %v633, %v1976
        %v1978 = vsel %vm997, %v1977, %v1973
        %v1979 = vlaneseq
        %v1980 = vshrl.u32 %v1979, 7
        %v1981 = vsub.s32 %v959, %v1980
        %v1982 = vrot.slane %v634, %v1981
        %v1983 = vlaneseq
        %v1984 = vshrl.u32 %v1983, 7
        %v1985 = vsub.s32 %v964, %v1984
        %v1986 = vrot.slane %v635, %v1985
        %v1987 = vsel %vm969, %v1986, %v1982
        %v1988 = vlaneseq
        %v1989 = vshrl.u32 %v1988, 7
        %v1990 = vsub.s32 %v971, %v1989
        %v1991 = vrot.slane %v636, %v1990
        %v1992 = vsel %vm976, %v1991, %v1987
        %v1993 = vlaneseq
        %v1994 = vshrl.u32 %v1993, 7
        %v1995 = vsub.s32 %v978, %v1994
        %v1996 = vrot.slane %v637, %v1995
        %v1997 = vsel %vm983, %v1996, %v1992
        %v1998 = vlaneseq
        %v1999 = vshrl.u32 %v1998, 7
        %v2000 = vsub.s32 %v985, %v1999
        %v2001 = vrot.slane %v638, %v2000
        %v2002 = vsel %vm990, %v2001, %v1997
        %v2003 = vlaneseq
        %v2004 = vshrl.u32 %v2003, 7
        %v2005 = vsub.s32 %v992, %v2004
        %v2006 = vrot.slane %v639, %v2005
        %v2007 = vsel %vm997, %v2006, %v2002
        %v2008 = vlaneseq
        %v2009 = vshrl.u32 %v2008, 7
        %v2010 = vsub.s32 %v959, %v2009
        %v2011 = vrot.slane %v640, %v2010
        %v2012 = vlaneseq
        %v2013 = vshrl.u32 %v2012, 7
        %v2014 = vsub.s32 %v964, %v2013
        %v2015 = vrot.slane %v641, %v2014
        %v2016 = vsel %vm969, %v2015, %v2011
        %v2017 = vlaneseq
        %v2018 = vshrl.u32 %v2017, 7
        %v2019 = vsub.s32 %v971, %v2018
        %v2020 = vrot.slane %v642, %v2019
        %v2021 = vsel %vm976, %v2020, %v2016
        %v2022 = vlaneseq
        %v2023 = vshrl.u32 %v2022, 7
        %v2024 = vsub.s32 %v978, %v2023
        %v2025 = vrot.slane %v643, %v2024
        %v2026 = vsel %vm983, %v2025, %v2021
        %v2027 = vlaneseq
        %v2028 = vshrl.u32 %v2027, 7
        %v2029 = vsub.s32 %v985, %v2028
        %v2030 = vrot.slane %v644, %v2029
        %v2031 = vsel %vm990, %v2030, %v2026
        %v2032 = vlaneseq
        %v2033 = vshrl.u32 %v2032, 7
        %v2034 = vsub.s32 %v992, %v2033
        %v2035 = vrot.slane %v645, %v2034
        %v2036 = vsel %vm997, %v2035, %v2031
        %v2037 = vlaneseq
        %v2038 = vshrl.u32 %v2037, 7
        %v2039 = vsub.s32 %v959, %v2038
        %v2040 = vrot.slane %v646, %v2039
        %v2041 = vlaneseq
        %v2042 = vshrl.u32 %v2041, 7
        %v2043 = vsub.s32 %v964, %v2042
        %v2044 = vrot.slane %v647, %v2043
        %v2045 = vsel %vm969, %v2044, %v2040
        %v2046 = vlaneseq
        %v2047 = vshrl.u32 %v2046, 7
        %v2048 = vsub.s32 %v971, %v2047
        %v2049 = vrot.slane %v648, %v2048
        %v2050 = vsel %vm976, %v2049, %v2045
        %v2051 = vlaneseq
        %v2052 = vshrl.u32 %v2051, 7
        %v2053 = vsub.s32 %v978, %v2052
        %v2054 = vrot.slane %v649, %v2053
        %v2055 = vsel %vm983, %v2054, %v2050
        %v2056 = vlaneseq
        %v2057 = vshrl.u32 %v2056, 7
        %v2058 = vsub.s32 %v985, %v2057
        %v2059 = vrot.slane %v650, %v2058
        %v2060 = vsel %vm990, %v2059, %v2055
        %v2061 = vlaneseq
        %v2062 = vshrl.u32 %v2061, 7
        %v2063 = vsub.s32 %v992, %v2062
        %v2064 = vrot.slane %v651, %v2063
        %v2065 = vsel %vm997, %v2064, %v2060
        %v2066 = vlaneseq
        %v2067 = vshrl.u32 %v2066, 7
        %v2068 = vsub.s32 %v959, %v2067
        %v2069 = vrot.slane %v652, %v2068
        %v2070 = vlaneseq
        %v2071 = vshrl.u32 %v2070, 7
        %v2072 = vsub.s32 %v964, %v2071
        %v2073 = vrot.slane %v653, %v2072
        %v2074 = vsel %vm969, %v2073, %v2069
        %v2075 = vlaneseq
        %v2076 = vshrl.u32 %v2075, 7
        %v2077 = vsub.s32 %v971, %v2076
        %v2078 = vrot.slane %v654, %v2077
        %v2079 = vsel %vm976, %v2078, %v2074
        %v2080 = vlaneseq
        %v2081 = vshrl.u32 %v2080, 7
        %v2082 = vsub.s32 %v978, %v2081
        %v2083 = vrot.slane %v655, %v2082
        %v2084 = vsel %vm983, %v2083, %v2079
        %v2085 = vlaneseq
        %v2086 = vshrl.u32 %v2085, 7
        %v2087 = vsub.s32 %v985, %v2086
        %v2088 = vrot.slane %v656, %v2087
        %v2089 = vsel %vm990, %v2088, %v2084
        %v2090 = vlaneseq
        %v2091 = vshrl.u32 %v2090, 7
        %v2092 = vsub.s32 %v992, %v2091
        %v2093 = vrot.slane %v657, %v2092
        %v2094 = vsel %vm997, %v2093, %v2089
        %v2095 = vsel %vm1434, %v1688, %v1659
        %v2096 = vsel %vm1436, %v1717, %v2095
        %v2097 = vsel %vm1438, %v1746, %v2096
        %v2098 = vsel %vm1440, %v1775, %v2097
        %v2099 = vsel %vm1442, %v1804, %v2098
        %v2100 = vsel %vm1444, %v1833, %v2099
        %v2101 = vsel %vm1446, %v1862, %v2100
        %v2102 = vsel %vm1434, %v1920, %v1891
        %v2103 = vsel %vm1436, %v1949, %v2102
        %v2104 = vsel %vm1438, %v1978, %v2103
        %v2105 = vsel %vm1440, %v2007, %v2104
        %v2106 = vsel %vm1442, %v2036, %v2105
        %v2107 = vsel %vm1444, %v2065, %v2106
        %v2108 = vsel %vm1446, %v2094, %v2107
        %v2109 = vsel %vm1455, %v2101, 0
        %v2111 = vsel %vm1455, %v2108, 0
        %2113 = vmatprep.subr.mxu0 0.0
        %2114 = vmatpush1.msra.mxu0 %v850
        %2115 = vmatprep.subr.mxu0 0.0
        %2116 = vmatpush1.msra.mxu0 %v851
        %2117 = vmatprep.subr.mxu0 0.0
        %2118 = vmatpush1.msra.mxu0 %v852
        %2119 = vmatprep.subr.mxu0 0.0
        %2120 = vmatpush1.msra.mxu0 %v853
        %2121 = vmatprep.subr.mxu0 0.0
        %2122 = vmatpush1.msra.mxu0 %v854
        %2123 = vmatprep.subr.mxu0 0.0
        %2124 = vmatpush1.msra.mxu0 %v855
        %2125 = vmatprep.subr.mxu0 0.0
        %2126 = vmatpush1.msra.mxu0 0.0
        %2127 = vmatprep.subr.mxu0 0.0
        %2128 = vmatpush1.msra.mxu0 0.0
        %2129 = vmatprep.subr.mxu0 0.0
        %2130 = vmatpush1.msra.mxu0 0.0
        %2131 = vmatprep.subr.mxu0 0.0
        %2132 = vmatpush1.msra.mxu0 0.0
        %2133 = vmatprep.subr.mxu0 0.0
        %2134 = vmatpush1.msra.mxu0 0.0
        %2135 = vmatprep.subr.mxu0 0.0
        %2136 = vmatpush1.msra.mxu0 0.0
        %2137 = vmatprep.subr.mxu0 0.0
        %2138 = vmatpush1.msra.mxu0 0.0
        %2139 = vmatprep.subr.mxu0 0.0
        %2140 = vmatpush1.msra.mxu0 0.0
        %2141 = vmatprep.subr.mxu0 0.0
        %2142 = vmatpush1.msra.mxu0 0.0
        %2143 = vmatprep.subr.mxu0 0.0
        %2144 = vmatpush1.msra.mxu0 0.0
        %2145 = vmatprep.subr.mxu0 0.0
        %2146 = vmatpush1.msra.mxu0 0.0
        %2147 = vmatprep.subr.mxu0 0.0
        %2148 = vmatpush1.msra.mxu0 0.0
        %2149 = vmatprep.subr.mxu0 0.0
        %2150 = vmatpush1.msra.mxu0 0.0
        %2151 = vmatprep.subr.mxu0 0.0
        %2152 = vmatpush1.msra.mxu0 0.0
        %2153 = vmatprep.subr.mxu0 0.0
        %2154 = vmatpush1.msra.mxu0 0.0
        %2155 = vmatprep.subr.mxu0 0.0
        %2156 = vmatpush1.msra.mxu0 0.0
        %2157 = vmatprep.subr.mxu0 0.0
        %2158 = vmatpush1.msra.mxu0 0.0
        %2159 = vmatprep.subr.mxu0 0.0
        %2160 = vmatpush1.msra.mxu0 0.0
        %2161 = vmatprep.subr.mxu0 0.0
        %2162 = vmatpush1.msra.mxu0 0.0
        %2163 = vmatprep.subr.mxu0 0.0
        %2164 = vmatpush1.msra.mxu0 0.0
        %2165 = vmatprep.subr.mxu0 0.0
        %2166 = vmatpush1.msra.mxu0 0.0
        %2167 = vmatprep.subr.mxu0 0.0
        %2168 = vmatpush1.msra.mxu0 0.0
        %2169 = vmatprep.subr.mxu0 0.0
        %2170 = vmatpush1.msra.mxu0 0.0
        %2171 = vmatprep.subr.mxu0 0.0
        %2172 = vmatpush1.msra.mxu0 0.0
        %2173 = vmatprep.subr.mxu0 0.0
        %2174 = vmatpush1.msra.mxu0 0.0
        %2175 = vmatprep.subr.mxu0 0.0
        %2176 = vmatpush1.msra.mxu0 0.0
        %2177 = vmatprep.mubr.f32.mxu0 0.0
        %2178 = vmatmul.mubr.f32.gmra.mrb[0].mxu0 %v2109
        %v2179 = vpop.f32.mrb[0].mxu0
        %v2180 = vadd.f32 %v1527, %v2179
        %v2181 = vpop.f32.mrb[0].mxu0
        %2182 = vmatprep.mubr.f32.mxu0 0.0
        %2183 = vmatmul.mubr.f32.gmra.mrb[0].mxu0 %v2111
        %v2184 = vpop.f32.mrb[0].mxu0
        %v2185 = vadd.f32 %v1532, %v2184
        %v2186 = vpop.f32.mrb[0].mxu0
        %2187 = vdwg.mxu0
        %v2188 = vld [vmem:[%s3] sm:$0x1]
        %v2190 = vlaneseq
        %v2191 = vshrl.u32 %v2190, 7
        %v2192 = vsub.s32 0, %v2191
        %v2193 = vrot.slane %v2188, %v2192
        %v2195 = vadd.f32 %v2180, %v2193
        %v2196 = vadd.f32 %v2185, %v2193
        %v2197 = vmax.f32 %v2195, 0.0
        %v2198 = vmax.f32 %v2196, 0.0
        %v2199 = vld [vmem:[%s4] sm:$0x3f]
        %v2200 = vld [vmem:[%s5] sm:$0x1]
        %v2202 = vlaneseq
        %v2203 = vshrl.u32 %v2202, 7
        %v2204 = vsub.s32 0, %v2203
        %v2205 = vrot.slane %v2200, %v2204
        %vm2207 = vcmask 48128
        %v2209 = vsel %vm2207, %v2197, 0
        %v2212 = vsel %vm2207, %v2198, 0
        %vm2214 = vcmask 1045504
        %v2216 = vsel %vm2214, %v2199, 0
        %2218 = vmatprep.subr.mxu0 0.0
        %2219 = vmatpush1.msra.mxu0 %v2216
        %2220 = vmatprep.subr.mxu0 0.0
        %2221 = vmatpush1.msra.mxu0 0.0
        %2222 = vmatprep.subr.mxu0 0.0
        %2223 = vmatpush1.msra.mxu0 0.0
        %2224 = vmatprep.subr.mxu0 0.0
        %2225 = vmatpush1.msra.mxu0 0.0
        %2226 = vmatprep.subr.mxu0 0.0
        %2227 = vmatpush1.msra.mxu0 0.0
        %2228 = vmatprep.subr.mxu0 0.0
        %2229 = vmatpush1.msra.mxu0 0.0
        %2230 = vmatprep.subr.mxu0 0.0
        %2231 = vmatpush1.msra.mxu0 0.0
        %2232 = vmatprep.subr.mxu0 0.0
        %2233 = vmatpush1.msra.mxu0 0.0
        %2234 = vmatprep.subr.mxu0 0.0
        %2235 = vmatpush1.msra.mxu0 0.0
        %2236 = vmatprep.subr.mxu0 0.0
        %2237 = vmatpush1.msra.mxu0 0.0
        %2238 = vmatprep.subr.mxu0 0.0
        %2239 = vmatpush1.msra.mxu0 0.0
        %2240 = vmatprep.subr.mxu0 0.0
        %2241 = vmatpush1.msra.mxu0 0.0
        %2242 = vmatprep.subr.mxu0 0.0
        %2243 = vmatpush1.msra.mxu0 0.0
        %2244 = vmatprep.subr.mxu0 0.0
        %2245 = vmatpush1.msra.mxu0 0.0
        %2246 = vmatprep.subr.mxu0 0.0
        %2247 = vmatpush1.msra.mxu0 0.0
        %2248 = vmatprep.subr.mxu0 0.0
        %2249 = vmatpush1.msra.mxu0 0.0
        %2250 = vmatprep.subr.mxu0 0.0
        %2251 = vmatpush1.msra.mxu0 0.0
        %2252 = vmatprep.subr.mxu0 0.0
        %2253 = vmatpush1.msra.mxu0 0.0
        %2254 = vmatprep.subr.mxu0 0.0
        %2255 = vmatpush1.msra.mxu0 0.0
        %2256 = vmatprep.subr.mxu0 0.0
        %2257 = vmatpush1.msra.mxu0 0.0
        %2258 = vmatprep.subr.mxu0 0.0
        %2259 = vmatpush1.msra.mxu0 0.0
        %2260 = vmatprep.subr.mxu0 0.0
        %2261 = vmatpush1.msra.mxu0 0.0
        %2262 = vmatprep.subr.mxu0 0.0
        %2263 = vmatpush1.msra.mxu0 0.0
        %2264 = vmatprep.subr.mxu0 0.0
        %2265 = vmatpush1.msra.mxu0 0.0
        %2266 = vmatprep.subr.mxu0 0.0
        %2267 = vmatpush1.msra.mxu0 0.0
        %2268 = vmatprep.subr.mxu0 0.0
        %2269 = vmatpush1.msra.mxu0 0.0
        %2270 = vmatprep.subr.mxu0 0.0
        %2271 = vmatpush1.msra.mxu0 0.0
        %2272 = vmatprep.subr.mxu0 0.0
        %2273 = vmatpush1.msra.mxu0 0.0
        %2274 = vmatprep.subr.mxu0 0.0
        %2275 = vmatpush1.msra.mxu0 0.0
        %2276 = vmatprep.subr.mxu0 0.0
        %2277 = vmatpush1.msra.mxu0 0.0
        %2278 = vmatprep.subr.mxu0 0.0
        %2279 = vmatpush1.msra.mxu0 0.0
        %2280 = vmatprep.subr.mxu0 0.0
        %2281 = vmatpush1.msra.mxu0 0.0
        %2282 = vmatprep.mubr.f32.mxu0 0.0
        %2283 = vmatmul.mubr.f32.gmra.mrb[0].mxu0 %v2209
        %v2284 = vpop.f32.mrb[0].mxu0
        %v2285 = vadd.f32 %v2205, %v2284
        %v2286 = vpop.f32.mrb[0].mxu0
        %2287 = vmatprep.mubr.f32.mxu0 0.0
        %2288 = vmatmul.mubr.f32.gmra.mrb[0].mxu0 %v2212
        %v2289 = vpop.f32.mrb[0].mxu0
        %v2290 = vadd.f32 %v2205, %v2289
        %v2291 = vpop.f32.mrb[0].mxu0
        %2292 = vdwg.mxu0
        %v2293 = vxor.u32 %v2285, 2147483648
        %v2294 = vxor.u32 %v2290, 2147483648
        %v2295 = vmul.f32 %v2293, 1.442695
        %v2296 = vpow.pop %v2295
        %v2297 = vmul.f32 %v2294, 1.442695
        %v2298 = vpow.pop %v2297
        %v2299 = vadd.f32 %v2296, 1.0
        %v2300 = vadd.f32 %v2298, 1.0
        %v2301 = vrcp.pop %v2299
        %v2302 = vmul.f32 1.0, %v2301
        %v2303 = vrcp.pop %v2300
        %v2304 = vmul.f32 1.0, %v2303
        %v2305 = vlaneseq
        %v2306 = vshrl.u32 %v2305, 7
        %v2307 = vsub.s32 0, %v2306
        %v2308 = vrot.slane %v2302, %v2307
        %2310 = vbcast.lane.b32.xlu0 %v2308, 256
        %v2311 = vpop.permute.xlu0 %2310
        %s2313 = sor.u32 256, 8
        %2314 = vbcast.lane.b32.xlu0 %v2308, %s2313
        %v2315 = vpop.permute.xlu0 %2314
        %s2317 = sor.u32 256, 16
        %2318 = vbcast.lane.b32.xlu0 %v2308, %s2317
        %v2319 = vpop.permute.xlu0 %2318
        %s2321 = sor.u32 256, 24
        %2322 = vbcast.lane.b32.xlu0 %v2308, %s2321
        %v2323 = vpop.permute.xlu0 %2322
        %s2325 = sor.u32 256, 32
        %2326 = vbcast.lane.b32.xlu0 %v2308, %s2325
        %v2327 = vpop.permute.xlu0 %2326
        %s2329 = sor.u32 256, 40
        %2330 = vbcast.lane.b32.xlu0 %v2308, %s2329
        %v2331 = vpop.permute.xlu0 %2330
        %v2332 = vlaneseq
        %v2333 = vshrl.u32 %v2332, 7
        %v2334 = vsub.s32 1, %v2333
        %v2335 = vrot.slane %v2302, %v2334
        %2337 = vbcast.lane.b32.xlu0 %v2335, 256
        %v2338 = vpop.permute.xlu0 %2337
        %s2340 = sor.u32 256, 8
        %2341 = vbcast.lane.b32.xlu0 %v2335, %s2340
        %v2342 = vpop.permute.xlu0 %2341
        %s2344 = sor.u32 256, 16
        %2345 = vbcast.lane.b32.xlu0 %v2335, %s2344
        %v2346 = vpop.permute.xlu0 %2345
        %s2348 = sor.u32 256, 24
        %2349 = vbcast.lane.b32.xlu0 %v2335, %s2348
        %v2350 = vpop.permute.xlu0 %2349
        %s2352 = sor.u32 256, 32
        %2353 = vbcast.lane.b32.xlu0 %v2335, %s2352
        %v2354 = vpop.permute.xlu0 %2353
        %s2356 = sor.u32 256, 40
        %2357 = vbcast.lane.b32.xlu0 %v2335, %s2356
        %v2358 = vpop.permute.xlu0 %2357
        %v2359 = vlaneseq
        %v2360 = vshrl.u32 %v2359, 7
        %v2361 = vsub.s32 2, %v2360
        %v2362 = vrot.slane %v2302, %v2361
        %2364 = vbcast.lane.b32.xlu0 %v2362, 256
        %v2365 = vpop.permute.xlu0 %2364
        %s2367 = sor.u32 256, 8
        %2368 = vbcast.lane.b32.xlu0 %v2362, %s2367
        %v2369 = vpop.permute.xlu0 %2368
        %s2371 = sor.u32 256, 16
        %2372 = vbcast.lane.b32.xlu0 %v2362, %s2371
        %v2373 = vpop.permute.xlu0 %2372
        %s2375 = sor.u32 256, 24
        %2376 = vbcast.lane.b32.xlu0 %v2362, %s2375
        %v2377 = vpop.permute.xlu0 %2376
        %s2379 = sor.u32 256, 32
        %2380 = vbcast.lane.b32.xlu0 %v2362, %s2379
        %v2381 = vpop.permute.xlu0 %2380
        %s2383 = sor.u32 256, 40
        %2384 = vbcast.lane.b32.xlu0 %v2362, %s2383
        %v2385 = vpop.permute.xlu0 %2384
        %v2386 = vlaneseq
        %v2387 = vshrl.u32 %v2386, 7
        %v2388 = vsub.s32 3, %v2387
        %v2389 = vrot.slane %v2302, %v2388
        %2391 = vbcast.lane.b32.xlu0 %v2389, 256
        %v2392 = vpop.permute.xlu0 %2391
        %s2394 = sor.u32 256, 8
        %2395 = vbcast.lane.b32.xlu0 %v2389, %s2394
        %v2396 = vpop.permute.xlu0 %2395
        %s2398 = sor.u32 256, 16
        %2399 = vbcast.lane.b32.xlu0 %v2389, %s2398
        %v2400 = vpop.permute.xlu0 %2399
        %s2402 = sor.u32 256, 24
        %2403 = vbcast.lane.b32.xlu0 %v2389, %s2402
        %v2404 = vpop.permute.xlu0 %2403
        %s2406 = sor.u32 256, 32
        %2407 = vbcast.lane.b32.xlu0 %v2389, %s2406
        %v2408 = vpop.permute.xlu0 %2407
        %s2410 = sor.u32 256, 40
        %2411 = vbcast.lane.b32.xlu0 %v2389, %s2410
        %v2412 = vpop.permute.xlu0 %2411
        %v2413 = vlaneseq
        %v2414 = vshrl.u32 %v2413, 7
        %v2415 = vsub.s32 4, %v2414
        %v2416 = vrot.slane %v2302, %v2415
        %2418 = vbcast.lane.b32.xlu0 %v2416, 256
        %v2419 = vpop.permute.xlu0 %2418
        %s2421 = sor.u32 256, 8
        %2422 = vbcast.lane.b32.xlu0 %v2416, %s2421
        %v2423 = vpop.permute.xlu0 %2422
        %s2425 = sor.u32 256, 16
        %2426 = vbcast.lane.b32.xlu0 %v2416, %s2425
        %v2427 = vpop.permute.xlu0 %2426
        %s2429 = sor.u32 256, 24
        %2430 = vbcast.lane.b32.xlu0 %v2416, %s2429
        %v2431 = vpop.permute.xlu0 %2430
        %s2433 = sor.u32 256, 32
        %2434 = vbcast.lane.b32.xlu0 %v2416, %s2433
        %v2435 = vpop.permute.xlu0 %2434
        %s2437 = sor.u32 256, 40
        %2438 = vbcast.lane.b32.xlu0 %v2416, %s2437
        %v2439 = vpop.permute.xlu0 %2438
        %v2440 = vlaneseq
        %v2441 = vshrl.u32 %v2440, 7
        %v2442 = vsub.s32 5, %v2441
        %v2443 = vrot.slane %v2302, %v2442
        %2445 = vbcast.lane.b32.xlu0 %v2443, 256
        %v2446 = vpop.permute.xlu0 %2445
        %s2448 = sor.u32 256, 8
        %2449 = vbcast.lane.b32.xlu0 %v2443, %s2448
        %v2450 = vpop.permute.xlu0 %2449
        %s2452 = sor.u32 256, 16
        %2453 = vbcast.lane.b32.xlu0 %v2443, %s2452
        %v2454 = vpop.permute.xlu0 %2453
        %s2456 = sor.u32 256, 24
        %2457 = vbcast.lane.b32.xlu0 %v2443, %s2456
        %v2458 = vpop.permute.xlu0 %2457
        %s2460 = sor.u32 256, 32
        %2461 = vbcast.lane.b32.xlu0 %v2443, %s2460
        %v2462 = vpop.permute.xlu0 %2461
        %s2464 = sor.u32 256, 40
        %2465 = vbcast.lane.b32.xlu0 %v2443, %s2464
        %v2466 = vpop.permute.xlu0 %2465
        %v2467 = vlaneseq
        %v2468 = vshrl.u32 %v2467, 7
        %v2469 = vsub.s32 6, %v2468
        %v2470 = vrot.slane %v2302, %v2469
        %2472 = vbcast.lane.b32.xlu0 %v2470, 256
        %v2473 = vpop.permute.xlu0 %2472
        %s2475 = sor.u32 256, 8
        %2476 = vbcast.lane.b32.xlu0 %v2470, %s2475
        %v2477 = vpop.permute.xlu0 %2476
        %s2479 = sor.u32 256, 16
        %2480 = vbcast.lane.b32.xlu0 %v2470, %s2479
        %v2481 = vpop.permute.xlu0 %2480
        %s2483 = sor.u32 256, 24
        %2484 = vbcast.lane.b32.xlu0 %v2470, %s2483
        %v2485 = vpop.permute.xlu0 %2484
        %s2487 = sor.u32 256, 32
        %2488 = vbcast.lane.b32.xlu0 %v2470, %s2487
        %v2489 = vpop.permute.xlu0 %2488
        %s2491 = sor.u32 256, 40
        %2492 = vbcast.lane.b32.xlu0 %v2470, %s2491
        %v2493 = vpop.permute.xlu0 %2492
        %v2494 = vlaneseq
        %v2495 = vshrl.u32 %v2494, 7
        %v2496 = vsub.s32 7, %v2495
        %v2497 = vrot.slane %v2302, %v2496
        %2499 = vbcast.lane.b32.xlu0 %v2497, 256
        %v2500 = vpop.permute.xlu0 %2499
        %s2502 = sor.u32 256, 8
        %2503 = vbcast.lane.b32.xlu0 %v2497, %s2502
        %v2504 = vpop.permute.xlu0 %2503
        %s2506 = sor.u32 256, 16
        %2507 = vbcast.lane.b32.xlu0 %v2497, %s2506
        %v2508 = vpop.permute.xlu0 %2507
        %s2510 = sor.u32 256, 24
        %2511 = vbcast.lane.b32.xlu0 %v2497, %s2510
        %v2512 = vpop.permute.xlu0 %2511
        %s2514 = sor.u32 256, 32
        %2515 = vbcast.lane.b32.xlu0 %v2497, %s2514
        %v2516 = vpop.permute.xlu0 %2515
        %s2518 = sor.u32 256, 40
        %2519 = vbcast.lane.b32.xlu0 %v2497, %s2518
        %v2520 = vpop.permute.xlu0 %2519
        %v2521 = vlaneseq
        %v2522 = vshrl.u32 %v2521, 7
        %v2523 = vsub.s32 0, %v2522
        %v2524 = vrot.slane %v2304, %v2523
        %2526 = vbcast.lane.b32.xlu0 %v2524, 256
        %v2527 = vpop.permute.xlu0 %2526
        %s2529 = sor.u32 256, 8
        %2530 = vbcast.lane.b32.xlu0 %v2524, %s2529
        %v2531 = vpop.permute.xlu0 %2530
        %s2533 = sor.u32 256, 16
        %2534 = vbcast.lane.b32.xlu0 %v2524, %s2533
        %v2535 = vpop.permute.xlu0 %2534
        %s2537 = sor.u32 256, 24
        %2538 = vbcast.lane.b32.xlu0 %v2524, %s2537
        %v2539 = vpop.permute.xlu0 %2538
        %s2541 = sor.u32 256, 32
        %2542 = vbcast.lane.b32.xlu0 %v2524, %s2541
        %v2543 = vpop.permute.xlu0 %2542
        %s2545 = sor.u32 256, 40
        %2546 = vbcast.lane.b32.xlu0 %v2524, %s2545
        %v2547 = vpop.permute.xlu0 %2546
        %v2548 = vlaneseq
        %v2549 = vshrl.u32 %v2548, 7
        %v2550 = vsub.s32 1, %v2549
        %v2551 = vrot.slane %v2304, %v2550
        %2553 = vbcast.lane.b32.xlu0 %v2551, 256
        %v2554 = vpop.permute.xlu0 %2553
        %s2556 = sor.u32 256, 8
        %2557 = vbcast.lane.b32.xlu0 %v2551, %s2556
        %v2558 = vpop.permute.xlu0 %2557
        %s2560 = sor.u32 256, 16
        %2561 = vbcast.lane.b32.xlu0 %v2551, %s2560
        %v2562 = vpop.permute.xlu0 %2561
        %s2564 = sor.u32 256, 24
        %2565 = vbcast.lane.b32.xlu0 %v2551, %s2564
        %v2566 = vpop.permute.xlu0 %2565
        %s2568 = sor.u32 256, 32
        %2569 = vbcast.lane.b32.xlu0 %v2551, %s2568
        %v2570 = vpop.permute.xlu0 %2569
        %s2572 = sor.u32 256, 40
        %2573 = vbcast.lane.b32.xlu0 %v2551, %s2572
        %v2574 = vpop.permute.xlu0 %2573
        %v2575 = vlaneseq
        %v2576 = vshrl.u32 %v2575, 7
        %v2577 = vsub.s32 2, %v2576
        %v2578 = vrot.slane %v2304, %v2577
        %2580 = vbcast.lane.b32.xlu0 %v2578, 256
        %v2581 = vpop.permute.xlu0 %2580
        %s2583 = sor.u32 256, 8
        %2584 = vbcast.lane.b32.xlu0 %v2578, %s2583
        %v2585 = vpop.permute.xlu0 %2584
        %s2587 = sor.u32 256, 16
        %2588 = vbcast.lane.b32.xlu0 %v2578, %s2587
        %v2589 = vpop.permute.xlu0 %2588
        %s2591 = sor.u32 256, 24
        %2592 = vbcast.lane.b32.xlu0 %v2578, %s2591
        %v2593 = vpop.permute.xlu0 %2592
        %s2595 = sor.u32 256, 32
        %2596 = vbcast.lane.b32.xlu0 %v2578, %s2595
        %v2597 = vpop.permute.xlu0 %2596
        %s2599 = sor.u32 256, 40
        %2600 = vbcast.lane.b32.xlu0 %v2578, %s2599
        %v2601 = vpop.permute.xlu0 %2600
        %v2602 = vlaneseq
        %v2603 = vshrl.u32 %v2602, 7
        %v2604 = vsub.s32 3, %v2603
        %v2605 = vrot.slane %v2304, %v2604
        %2607 = vbcast.lane.b32.xlu0 %v2605, 256
        %v2608 = vpop.permute.xlu0 %2607
        %s2610 = sor.u32 256, 8
        %2611 = vbcast.lane.b32.xlu0 %v2605, %s2610
        %v2612 = vpop.permute.xlu0 %2611
        %s2614 = sor.u32 256, 16
        %2615 = vbcast.lane.b32.xlu0 %v2605, %s2614
        %v2616 = vpop.permute.xlu0 %2615
        %s2618 = sor.u32 256, 24
        %2619 = vbcast.lane.b32.xlu0 %v2605, %s2618
        %v2620 = vpop.permute.xlu0 %2619
        %s2622 = sor.u32 256, 32
        %2623 = vbcast.lane.b32.xlu0 %v2605, %s2622
        %v2624 = vpop.permute.xlu0 %2623
        %s2626 = sor.u32 256, 40
        %2627 = vbcast.lane.b32.xlu0 %v2605, %s2626
        %v2628 = vpop.permute.xlu0 %2627
        %v2629 = vlaneseq
        %v2630 = vshrl.u32 %v2629, 7
        %v2631 = vsub.s32 4, %v2630
        %v2632 = vrot.slane %v2304, %v2631
        %2634 = vbcast.lane.b32.xlu0 %v2632, 256
        %v2635 = vpop.permute.xlu0 %2634
        %s2637 = sor.u32 256, 8
        %2638 = vbcast.lane.b32.xlu0 %v2632, %s2637
        %v2639 = vpop.permute.xlu0 %2638
        %s2641 = sor.u32 256, 16
        %2642 = vbcast.lane.b32.xlu0 %v2632, %s2641
        %v2643 = vpop.permute.xlu0 %2642
        %s2645 = sor.u32 256, 24
        %2646 = vbcast.lane.b32.xlu0 %v2632, %s2645
        %v2647 = vpop.permute.xlu0 %2646
        %s2649 = sor.u32 256, 32
        %2650 = vbcast.lane.b32.xlu0 %v2632, %s2649
        %v2651 = vpop.permute.xlu0 %2650
        %s2653 = sor.u32 256, 40
        %2654 = vbcast.lane.b32.xlu0 %v2632, %s2653
        %v2655 = vpop.permute.xlu0 %2654
        %v2656 = vlaneseq
        %v2657 = vshrl.u32 %v2656, 7
        %v2658 = vsub.s32 5, %v2657
        %v2659 = vrot.slane %v2304, %v2658
        %2661 = vbcast.lane.b32.xlu0 %v2659, 256
        %v2662 = vpop.permute.xlu0 %2661
        %s2664 = sor.u32 256, 8
        %2665 = vbcast.lane.b32.xlu0 %v2659, %s2664
        %v2666 = vpop.permute.xlu0 %2665
        %s2668 = sor.u32 256, 16
        %2669 = vbcast.lane.b32.xlu0 %v2659, %s2668
        %v2670 = vpop.permute.xlu0 %2669
        %s2672 = sor.u32 256, 24
        %2673 = vbcast.lane.b32.xlu0 %v2659, %s2672
        %v2674 = vpop.permute.xlu0 %2673
        %s2676 = sor.u32 256, 32
        %2677 = vbcast.lane.b32.xlu0 %v2659, %s2676
        %v2678 = vpop.permute.xlu0 %2677
        %s2680 = sor.u32 256, 40
        %2681 = vbcast.lane.b32.xlu0 %v2659, %s2680
        %v2682 = vpop.permute.xlu0 %2681
        %v2683 = vlaneseq
        %v2684 = vshrl.u32 %v2683, 7
        %v2685 = vsub.s32 6, %v2684
        %v2686 = vrot.slane %v2304, %v2685
        %2688 = vbcast.lane.b32.xlu0 %v2686, 256
        %v2689 = vpop.permute.xlu0 %2688
        %s2691 = sor.u32 256, 8
        %2692 = vbcast.lane.b32.xlu0 %v2686, %s2691
        %v2693 = vpop.permute.xlu0 %2692
        %s2695 = sor.u32 256, 16
        %2696 = vbcast.lane.b32.xlu0 %v2686, %s2695
        %v2697 = vpop.permute.xlu0 %2696
        %s2699 = sor.u32 256, 24
        %2700 = vbcast.lane.b32.xlu0 %v2686, %s2699
        %v2701 = vpop.permute.xlu0 %2700
        %s2703 = sor.u32 256, 32
        %2704 = vbcast.lane.b32.xlu0 %v2686, %s2703
        %v2705 = vpop.permute.xlu0 %2704
        %s2707 = sor.u32 256, 40
        %2708 = vbcast.lane.b32.xlu0 %v2686, %s2707
        %v2709 = vpop.permute.xlu0 %2708
        %v2710 = vlaneseq
        %v2711 = vshrl.u32 %v2710, 7
        %v2712 = vsub.s32 7, %v2711
        %v2713 = vrot.slane %v2304, %v2712
        %2715 = vbcast.lane.b32.xlu0 %v2713, 256
        %v2716 = vpop.permute.xlu0 %2715
        %s2718 = sor.u32 256, 8
        %2719 = vbcast.lane.b32.xlu0 %v2713, %s2718
        %v2720 = vpop.permute.xlu0 %2719
        %s2722 = sor.u32 256, 16
        %2723 = vbcast.lane.b32.xlu0 %v2713, %s2722
        %v2724 = vpop.permute.xlu0 %2723
        %s2726 = sor.u32 256, 24
        %2727 = vbcast.lane.b32.xlu0 %v2713, %s2726
        %v2728 = vpop.permute.xlu0 %2727
        %s2730 = sor.u32 256, 32
        %2731 = vbcast.lane.b32.xlu0 %v2713, %s2730
        %v2732 = vpop.permute.xlu0 %2731
        %s2734 = sor.u32 256, 40
        %2735 = vbcast.lane.b32.xlu0 %v2713, %s2734
        %v2736 = vpop.permute.xlu0 %2735
        %v2737 = vmul.f32 %v273, %v2311
        %v2738 = vmul.f32 %v274, %v2315
        %v2739 = vmul.f32 %v275, %v2319
        %v2740 = vmul.f32 %v276, %v2323
        %v2741 = vmul.f32 %v277, %v2327
        %v2742 = vmul.f32 %v278, %v2331
        %v2743 = vmul.f32 %v279, %v2338
        %v2744 = vmul.f32 %v280, %v2342
        %v2745 = vmul.f32 %v281, %v2346
        %v2746 = vmul.f32 %v282, %v2350
        %v2747 = vmul.f32 %v283, %v2354
        %v2748 = vmul.f32 %v284, %v2358
        %v2749 = vmul.f32 %v285, %v2365
        %v2750 = vmul.f32 %v286, %v2369
        %v2751 = vmul.f32 %v287, %v2373
        %v2752 = vmul.f32 %v288, %v2377
        %v2753 = vmul.f32 %v289, %v2381
        %v2754 = vmul.f32 %v290, %v2385
        %v2755 = vmul.f32 %v291, %v2392
        %v2756 = vmul.f32 %v292, %v2396
        %v2757 = vmul.f32 %v293, %v2400
        %v2758 = vmul.f32 %v294, %v2404
        %v2759 = vmul.f32 %v295, %v2408
        %v2760 = vmul.f32 %v296, %v2412
        %v2761 = vmul.f32 %v297, %v2419
        %v2762 = vmul.f32 %v298, %v2423
        %v2763 = vmul.f32 %v299, %v2427
        %v2764 = vmul.f32 %v300, %v2431
        %v2765 = vmul.f32 %v301, %v2435
        %v2766 = vmul.f32 %v302, %v2439
        %v2767 = vmul.f32 %v303, %v2446
        %v2768 = vmul.f32 %v304, %v2450
        %v2769 = vmul.f32 %v305, %v2454
        %v2770 = vmul.f32 %v306, %v2458
        %v2771 = vmul.f32 %v307, %v2462
        %v2772 = vmul.f32 %v308, %v2466
        %v2773 = vmul.f32 %v309, %v2473
        %v2774 = vmul.f32 %v310, %v2477
        %v2775 = vmul.f32 %v311, %v2481
        %v2776 = vmul.f32 %v312, %v2485
        %v2777 = vmul.f32 %v313, %v2489
        %v2778 = vmul.f32 %v314, %v2493
        %v2779 = vmul.f32 %v315, %v2500
        %v2780 = vmul.f32 %v316, %v2504
        %v2781 = vmul.f32 %v317, %v2508
        %v2782 = vmul.f32 %v318, %v2512
        %v2783 = vmul.f32 %v319, %v2516
        %v2784 = vmul.f32 %v320, %v2520
        %v2785 = vmul.f32 %v321, %v2527
        %v2786 = vmul.f32 %v322, %v2531
        %v2787 = vmul.f32 %v323, %v2535
        %v2788 = vmul.f32 %v324, %v2539
        %v2789 = vmul.f32 %v325, %v2543
        %v2790 = vmul.f32 %v326, %v2547
        %v2791 = vmul.f32 %v327, %v2554
        %v2792 = vmul.f32 %v328, %v2558
        %v2793 = vmul.f32 %v329, %v2562
        %v2794 = vmul.f32 %v330, %v2566
        %v2795 = vmul.f32 %v331, %v2570
        %v2796 = vmul.f32 %v332, %v2574
        %v2797 = vmul.f32 %v333, %v2581
        %v2798 = vmul.f32 %v334, %v2585
        %v2799 = vmul.f32 %v335, %v2589
        %v2800 = vmul.f32 %v336, %v2593
        %v2801 = vmul.f32 %v337, %v2597
        %v2802 = vmul.f32 %v338, %v2601
        %v2803 = vmul.f32 %v339, %v2608
        %v2804 = vmul.f32 %v340, %v2612
        %v2805 = vmul.f32 %v341, %v2616
        %v2806 = vmul.f32 %v342, %v2620
        %v2807 = vmul.f32 %v343, %v2624
        %v2808 = vmul.f32 %v344, %v2628
        %v2809 = vmul.f32 %v345, %v2635
        %v2810 = vmul.f32 %v346, %v2639
        %v2811 = vmul.f32 %v347, %v2643
        %v2812 = vmul.f32 %v348, %v2647
        %v2813 = vmul.f32 %v349, %v2651
        %v2814 = vmul.f32 %v350, %v2655
        %v2815 = vmul.f32 %v351, %v2662
        %v2816 = vmul.f32 %v352, %v2666
        %v2817 = vmul.f32 %v353, %v2670
        %v2818 = vmul.f32 %v354, %v2674
        %v2819 = vmul.f32 %v355, %v2678
        %v2820 = vmul.f32 %v356, %v2682
        %v2821 = vmul.f32 %v357, %v2689
        %v2822 = vmul.f32 %v358, %v2693
        %v2823 = vmul.f32 %v359, %v2697
        %v2824 = vmul.f32 %v360, %v2701
        %v2825 = vmul.f32 %v361, %v2705
        %v2826 = vmul.f32 %v362, %v2709
        %v2827 = vmul.f32 %v363, %v2716
        %v2828 = vmul.f32 %v364, %v2720
        %v2829 = vmul.f32 %v365, %v2724
        %v2830 = vmul.f32 %v366, %v2728
        %v2831 = vmul.f32 %v367, %v2732
        %v2832 = vmul.f32 %v368, %v2736
        %2833 = vst [vmem:[%s270] sm:$0xff] %v2737
        %2834 = vst [vmem:[%s270 + $0x8] sm:$0xff] %v2738
        %2835 = vst [vmem:[%s270 + $0x10] sm:$0xff] %v2739
        %2836 = vst [vmem:[%s270 + $0x18] sm:$0xff] %v2740
        %2837 = vst [vmem:[%s270 + $0x20] sm:$0xff] %v2741
        %2838 = vst [vmem:[%s270 + $0x28] sm:$0xff] %v2742
        %2839 = vst [vmem:[%s270 + $0x30] sm:$0xff] %v2743
        %2840 = vst [vmem:[%s270 + $0x38] sm:$0xff] %v2744
        %2841 = vst [vmem:[%s270 + $0x40] sm:$0xff] %v2745
        %2842 = vst [vmem:[%s270 + $0x48] sm:$0xff] %v2746
        %2843 = vst [vmem:[%s270 + $0x50] sm:$0xff] %v2747
        %2844 = vst [vmem:[%s270 + $0x58] sm:$0xff] %v2748
        %2845 = vst [vmem:[%s270 + $0x60] sm:$0xff] %v2749
        %2846 = vst [vmem:[%s270 + $0x68] sm:$0xff] %v2750
        %2847 = vst [vmem:[%s270 + $0x70] sm:$0xff] %v2751
        %2848 = vst [vmem:[%s270 + $0x78] sm:$0xff] %v2752
        %2849 = vst [vmem:[%s270 + $0x80] sm:$0xff] %v2753
        %2850 = vst [vmem:[%s270 + $0x88] sm:$0xff] %v2754
        %2851 = vst [vmem:[%s270 + $0x90] sm:$0xff] %v2755
        %2852 = vst [vmem:[%s270 + $0x98] sm:$0xff] %v2756
        %2853 = vst [vmem:[%s270 + $0xa0] sm:$0xff] %v2757
        %2854 = vst [vmem:[%s270 + $0xa8] sm:$0xff] %v2758
        %2855 = vst [vmem:[%s270 + $0xb0] sm:$0xff] %v2759
        %2856 = vst [vmem:[%s270 + $0xb8] sm:$0xff] %v2760
        %2857 = vst [vmem:[%s270 + $0xc0] sm:$0xff] %v2761
        %2858 = vst [vmem:[%s270 + $0xc8] sm:$0xff] %v2762
        %2859 = vst [vmem:[%s270 + $0xd0] sm:$0xff] %v2763
        %2860 = vst [vmem:[%s270 + $0xd8] sm:$0xff] %v2764
        %2861 = vst [vmem:[%s270 + $0xe0] sm:$0xff] %v2765
        %2862 = vst [vmem:[%s270 + $0xe8] sm:$0xff] %v2766
        %2863 = vst [vmem:[%s270 + $0xf0] sm:$0xff] %v2767
        %2864 = vst [vmem:[%s270 + $0xf8] sm:$0xff] %v2768
        %2865 = vst [vmem:[%s270 + $0x100] sm:$0xff] %v2769
        %2866 = vst [vmem:[%s270 + $0x108] sm:$0xff] %v2770
        %2867 = vst [vmem:[%s270 + $0x110] sm:$0xff] %v2771
        %2868 = vst [vmem:[%s270 + $0x118] sm:$0xff] %v2772
        %2869 = vst [vmem:[%s270 + $0x120] sm:$0xff] %v2773
        %2870 = vst [vmem:[%s270 + $0x128] sm:$0xff] %v2774
        %2871 = vst [vmem:[%s270 + $0x130] sm:$0xff] %v2775
        %2872 = vst [vmem:[%s270 + $0x138] sm:$0xff] %v2776
        %2873 = vst [vmem:[%s270 + $0x140] sm:$0xff] %v2777
        %2874 = vst [vmem:[%s270 + $0x148] sm:$0xff] %v2778
        %2875 = vst [vmem:[%s270 + $0x150] sm:$0xff] %v2779
        %2876 = vst [vmem:[%s270 + $0x158] sm:$0xff] %v2780
        %2877 = vst [vmem:[%s270 + $0x160] sm:$0xff] %v2781
        %2878 = vst [vmem:[%s270 + $0x168] sm:$0xff] %v2782
        %2879 = vst [vmem:[%s270 + $0x170] sm:$0xff] %v2783
        %2880 = vst [vmem:[%s270 + $0x178] sm:$0xff] %v2784
        %2881 = vst [vmem:[%s270 + $0x180] sm:$0xff] %v2785
        %2882 = vst [vmem:[%s270 + $0x188] sm:$0xff] %v2786
        %2883 = vst [vmem:[%s270 + $0x190] sm:$0xff] %v2787
        %2884 = vst [vmem:[%s270 + $0x198] sm:$0xff] %v2788
        %2885 = vst [vmem:[%s270 + $0x1a0] sm:$0xff] %v2789
        %2886 = vst [vmem:[%s270 + $0x1a8] sm:$0xff] %v2790
        %2887 = vst [vmem:[%s270 + $0x1b0] sm:$0xff] %v2791
        %2888 = vst [vmem:[%s270 + $0x1b8] sm:$0xff] %v2792
        %2889 = vst [vmem:[%s270 + $0x1c0] sm:$0xff] %v2793
        %2890 = vst [vmem:[%s270 + $0x1c8] sm:$0xff] %v2794
        %2891 = vst [vmem:[%s270 + $0x1d0] sm:$0xff] %v2795
        %2892 = vst [vmem:[%s270 + $0x1d8] sm:$0xff] %v2796
        %2893 = vst [vmem:[%s270 + $0x1e0] sm:$0xff] %v2797
        %2894 = vst [vmem:[%s270 + $0x1e8] sm:$0xff] %v2798
        %2895 = vst [vmem:[%s270 + $0x1f0] sm:$0xff] %v2799
        %2896 = vst [vmem:[%s270 + $0x1f8] sm:$0xff] %v2800
        %2897 = vst [vmem:[%s270 + $0x200] sm:$0xff] %v2801
        %2898 = vst [vmem:[%s270 + $0x208] sm:$0xff] %v2802
        %2899 = vst [vmem:[%s270 + $0x210] sm:$0xff] %v2803
        %2900 = vst [vmem:[%s270 + $0x218] sm:$0xff] %v2804
        %2901 = vst [vmem:[%s270 + $0x220] sm:$0xff] %v2805
        %2902 = vst [vmem:[%s270 + $0x228] sm:$0xff] %v2806
        %2903 = vst [vmem:[%s270 + $0x230] sm:$0xff] %v2807
        %2904 = vst [vmem:[%s270 + $0x238] sm:$0xff] %v2808
        %2905 = vst [vmem:[%s270 + $0x240] sm:$0xff] %v2809
        %2906 = vst [vmem:[%s270 + $0x248] sm:$0xff] %v2810
        %2907 = vst [vmem:[%s270 + $0x250] sm:$0xff] %v2811
        %2908 = vst [vmem:[%s270 + $0x258] sm:$0xff] %v2812
        %2909 = vst [vmem:[%s270 + $0x260] sm:$0xff] %v2813
        %2910 = vst [vmem:[%s270 + $0x268] sm:$0xff] %v2814
        %2911 = vst [vmem:[%s270 + $0x270] sm:$0xff] %v2815
        %2912 = vst [vmem:[%s270 + $0x278] sm:$0xff] %v2816
        %2913 = vst [vmem:[%s270 + $0x280] sm:$0xff] %v2817
        %2914 = vst [vmem:[%s270 + $0x288] sm:$0xff] %v2818
        %2915 = vst [vmem:[%s270 + $0x290] sm:$0xff] %v2819
        %2916 = vst [vmem:[%s270 + $0x298] sm:$0xff] %v2820
        %2917 = vst [vmem:[%s270 + $0x2a0] sm:$0xff] %v2821
        %2918 = vst [vmem:[%s270 + $0x2a8] sm:$0xff] %v2822
        %2919 = vst [vmem:[%s270 + $0x2b0] sm:$0xff] %v2823
        %2920 = vst [vmem:[%s270 + $0x2b8] sm:$0xff] %v2824
        %2921 = vst [vmem:[%s270 + $0x2c0] sm:$0xff] %v2825
        %2922 = vst [vmem:[%s270 + $0x2c8] sm:$0xff] %v2826
        %2923 = vst [vmem:[%s270 + $0x2d0] sm:$0xff] %v2827
        %2924 = vst [vmem:[%s270 + $0x2d8] sm:$0xff] %v2828
        %2925 = vst [vmem:[%s270 + $0x2e0] sm:$0xff] %v2829
        %2926 = vst [vmem:[%s270 + $0x2e8] sm:$0xff] %v2830
        %2927 = vst [vmem:[%s270 + $0x2f0] sm:$0xff] %v2831
        %2928 = vst [vmem:[%s270 + $0x2f8] sm:$0xff] %v2832
        %s2929 = sand.u32 %s162, 1
        %s2930 = scalar_lea.sflag [#allocation4], %s2929
        %s2931 = sand.u32 %s162, 1
        %s2932 = smul.addr %s2931, 768
        %s2933 = scalar_lea.vmem [#allocation5], %s2932
        // Predicated region
        $region49: #{tpu_custom_call.1} parent=43 // pred_check
          %p2934 = pneg %p172
        $region50: #{tpu_custom_call.1} parent=43 // pred_check_branch
          %2936 = sbr.rel (%p2934) target = $region52
        $region51: #{tpu_custom_call.1} parent=43 // pred_region
          %s2937 = smul.u32 16, %s23
          %s2939 = ssub.s32 12288, 12288
          %2940 = vsyncadd %s2930, %s2939
          %s2941 = smul.addr %s2937, 6
          %s2942 = smul.addr %s2941, 128
          %s2943 = scalar_lea.hbm %s6, %s2942
          %s2944 = sshll.u32 %s2933, 4
          %s2945 = int_to_ptr.vmem [resolvable:$true] %s2944
          %2950 = dma.vmem_to_hbm [thread:$0]  %s2945, 12288, %s2943, %s2930, 128, 128, 8
        $region52: #{tpu_custom_call.1} parent=43 // pred_fallthru
          _
      $region44: #{tpu_custom_call.1} parent=5 // pred_fallthru
        _
      %p2951 = scmp.le.s32.totalorder 2, %s18
      // Predicated region
      $region53: #{tpu_custom_call.1} parent=5 // pred_check
        %p2952 = pneg %p2951
      $region54: #{tpu_custom_call.1} parent=5 // pred_check_branch
        %2954 = sbr.rel (%p2952) target = $region56
      $region55: #{tpu_custom_call.1} parent=5 // pred_region
        %s2955 = ssub.s32 %s18, 2
        // Predicated region
        $region57: #{tpu_custom_call.1} parent=55 // pred_check
          %p2956 = pneg %p178
        $region58: #{tpu_custom_call.1} parent=55 // pred_check_branch
          %2958 = sbr.rel (%p2956) target = $region60
        $region59: #{tpu_custom_call.1} parent=55 // pred_region
          %s2959 = sand.u32 %s163, 1
          %s2960 = scalar_lea.sflag [#allocation4], %s2959
          %s2961 = sand.u32 %s163, 1
          %s2962 = smul.addr %s2961, 768
          %s2963 = scalar_lea.vmem [#allocation5], %s2962
          %2964 = dma.done %s2960, 12288
        $region60: #{tpu_custom_call.1} parent=55 // pred_fallthru
          _
      $region56: #{tpu_custom_call.1} parent=5 // pred_fallthru
        _
    $region6: #{tpu_custom_call.1} parent=1 // loop_footer
      %s22 = sadd.s32 1, %s18
    $region7: #{tpu_custom_call.1} parent=1 // loop_footer_branch
      %17 = sbr.rel target = $region3
    $region8: #{tpu_custom_call.1} parent=1 // loop_exit
      _
    %2965 = vsyncpa [#allocation3], 1
    %s2966 = scalar_lea.sflag [#allocation3], 1
    %2967 = vsyncpa %s2966, 1
    %2968 = vsyncpa [#allocation4], 1
    %s2969 = scalar_lea.sflag [#allocation4], 1
    %2970 = vsyncpa %s2969, 1

</llo_original>
